<compile_context>
chip_gen: v5e
topology: v5e:2x2
jax: 0.10.0
libtpu: 0.0.40
codegen_flags: <defaults>
</compile_context>

<pallas_src>
import functools
import math

import jax
import jax.numpy as jnp
import numpy as np
from jax.experimental import pallas as pl
from jax.experimental.pallas import tpu as pltpu

# ---------------------------------------------------------------------------
# Model hyper-parameters (small, consistent with the module's __init__)
# ---------------------------------------------------------------------------
EMBED = 32
HEADS = 4
HEAD_DIM = EMBED // HEADS
FWD_EXP = 2
HIDDEN = FWD_EXP * EMBED
SEQ = 8
BATCH = 2
LN_EPS = 1e-5


def _layernorm(x, gamma, beta):
    # x: (R, E), gamma/beta: (1, E); matches torch.nn.LayerNorm(embed_size).
    mean = jnp.mean(x, axis=-1, keepdims=True)
    var = jnp.mean((x - mean) ** 2, axis=-1, keepdims=True)
    inv = jax.lax.rsqrt(var + LN_EPS)        # EUP
    return (x - mean) * inv * gamma + beta


def transformer_block_kernel(
    v_ref, k_ref, q_ref,
    wv_ref, wk_ref, wq_ref, wo_ref, bo_ref,
    g1_ref, b1_ref, g2_ref, b2_ref,
    w1_ref, bf1_ref, w2_ref, bf2_ref,
    out_ref,
    *, batch, heads, head_dim,
):
    v = v_ref[...]                      # (N*Lv, E)
    k = k_ref[...]                      # (N*Lk, E)
    q = q_ref[...]                      # (N*Lq, E)  (also the residual input)
    lv = v.shape[0] // batch
    lk = k.shape[0] // batch
    lq = q.shape[0] // batch
    n_lq = q.shape[0]

    # Attention accumulator: start from residual + fc_out bias, then fold
    # each head's context straight through its slice of Wo (no lane concat).
    acc = q + bo_ref[...]               # (N*Lq, E)

    for h in range(heads):              # static unrolled loop, heads = 4
        # Per-head projections: weights indexed on the leading ref axis
        # (static, zero-cost); 1/sqrt(E) already folded into wq on the host.
        q_h = jnp.dot(q, wq_ref[h], preferred_element_type=jnp.float32)  # (N*Lq, D)
        k_h = jnp.dot(k, wk_ref[h], preferred_element_type=jnp.float32)  # (N*Lk, D)
        v_h = jnp.dot(v, wv_ref[h], preferred_element_type=jnp.float32)  # (N*Lv, D)

        q_b = q_h.reshape(batch, lq, head_dim)   # sublane-tile-aligned reshape
        k_b = k_h.reshape(batch, lk, head_dim)
        v_b = v_h.reshape(batch, lv, head_dim)

        energy = jnp.einsum("nqd,nkd->nqk", q_b, k_b,
                            preferred_element_type=jnp.float32)          # (N, Lq, Lk)
        m = jnp.max(energy, axis=-1, keepdims=True)
        p = jnp.exp(energy - m)                                          # EUP
        denom = jnp.sum(p, axis=-1, keepdims=True)
        attn = p * pl.reciprocal(denom, approx=True)                     # EUP
        ctx = jnp.einsum("nqk,nkd->nqd", attn, v_b,
                         preferred_element_type=jnp.float32)             # (N, Lq, D)

        acc = acc + jnp.dot(ctx.reshape(n_lq, head_dim), wo_ref[h],
                            preferred_element_type=jnp.float32)

    # LayerNorm1 (dropout = identity).
    x = _layernorm(acc, g1_ref[...], b1_ref[...])

    # FFN: Linear -> ReLU -> Linear (weights pre-transposed to [in, out]).
    h1 = jnp.dot(x, w1_ref[...], preferred_element_type=jnp.float32) + bf1_ref[...]
    h1 = jnp.maximum(h1, 0.0)
    ff = jnp.dot(h1, w2_ref[...], preferred_element_type=jnp.float32) + bf2_ref[...]

    # Residual + LayerNorm2 (dropout = identity).
    out_ref[...] = _layernorm(ff + x, g2_ref[...], b2_ref[...]).astype(out_ref.dtype)


def transformer_block(value, key, query, params):
    N, Lv, E = value.shape
    _, Lk, _ = key.shape
    _, Lq, _ = query.shape
    assert Lk == Lv, "attention requires key_len == value_len"
    assert E == HEADS * HEAD_DIM

    scale = 1.0 / math.sqrt(float(E))   # torch divides energy by embed_size**0.5

    # Free host-side reshapes / weight prep (done once, outside the kernel).
    v2 = value.reshape(N * Lv, E)
    k2 = key.reshape(N * Lk, E)
    q2 = query.reshape(N * Lq, E)

    def split_heads_in_out(w):
        # torch weight (out, in) -> [in, out] -> per-head (H, in=E, out=D)
        wt = w.T                                           # (E_in, E_out)
        return jnp.transpose(wt.reshape(E, HEADS, HEAD_DIM), (1, 0, 2))

    wv_h = split_heads_in_out(params["wv"])                # (H, E, D)
    wk_h = split_heads_in_out(params["wk"])                # (H, E, D)
    wq_h = split_heads_in_out(params["wq"]) * scale        # scale folded in
    wo_h = params["wo"].T.reshape(HEADS, HEAD_DIM, E)      # (H, D, E)
    w1_t = params["w1"].T                                  # (E, HIDDEN)
    w2_t = params["w2"].T                                  # (HIDDEN, E)

    args = (v2, k2, q2, wv_h, wk_h, wq_h, wo_h, params["bo"],
            params["g1"], params["b1"], params["g2"], params["b2"],
            w1_t, params["bf1"], w2_t, params["bf2"])

    vmem = pl.BlockSpec(memory_space=pltpu.MemorySpace.VMEM)
    kernel = functools.partial(transformer_block_kernel,
                               batch=N, heads=HEADS, head_dim=HEAD_DIM)

    # Single kernel invocation (no grid): whole-array blocks resident in VMEM.
    # Total padded footprint is well under 1 MiB, so no tiling is needed on
    # any TPU generation (v5e / v6e / v7x).
    out_flat = pl.pallas_call(
        kernel,
        out_shape=jax.ShapeDtypeStruct((N * Lq, E), query.dtype),
        in_specs=[vmem] * len(args),
        out_specs=vmem,
    )(*args)
    return out_flat.reshape(N, Lq, E)


# ---------------------------------------------------------------------------
# Pure-JAX reference (mirrors the PyTorch forward exactly) for verification.
# ---------------------------------------------------------------------------
def reference(value, key, query, p):
    N, Lq, E = query.shape
    values = value @ p["wv"].T
    keys = key @ p["wk"].T
    queries = query @ p["wq"].T
    values = values.reshape(N, -1, HEADS, HEAD_DIM)
    keys = keys.reshape(N, -1, HEADS, HEAD_DIM)
    queries = queries.reshape(N, -1, HEADS, HEAD_DIM)
    energy = jnp.einsum("nqhd,nkhd->nhqk", queries, keys)
    attn = jax.nn.softmax(energy / math.sqrt(E), axis=3)
    out = jnp.einsum("nhql,nlhd->nqhd", attn, values).reshape(N, Lq, E)
    attn_out = out @ p["wo"].T + p["bo"][0]

    def ln(x, g, b):
        m = x.mean(-1, keepdims=True)
        v = ((x - m) ** 2).mean(-1, keepdims=True)
        return (x - m) / jnp.sqrt(v + LN_EPS) * g[0] + b[0]

    x = ln(attn_out + query, p["g1"], p["b1"])
    ff = jnp.maximum(x @ p["w1"].T + p["bf1"][0], 0.0) @ p["w2"].T + p["bf2"][0]
    return ln(ff + x, p["g2"], p["b2"])


def init_params(rng):
    keys = jax.random.split(rng, 8)
    s = 0.02
    params = {
        "wv": jax.random.normal(keys[0], (EMBED, EMBED), jnp.float32) * s,
        "wk": jax.random.normal(keys[1], (EMBED, EMBED), jnp.float32) * s,
        "wq": jax.random.normal(keys[2], (EMBED, EMBED), jnp.float32) * s,
        "wo": jax.random.normal(keys[3], (EMBED, EMBED), jnp.float32) * s,
        "bo": jnp.zeros((1, EMBED), jnp.float32),
        "g1": jnp.ones((1, EMBED), jnp.float32),
        "b1": jnp.zeros((1, EMBED), jnp.float32),
        "g2": jnp.ones((1, EMBED), jnp.float32),
        "b2": jnp.zeros((1, EMBED), jnp.float32),
        "w1": jax.random.normal(keys[4], (HIDDEN, EMBED), jnp.float32) * s,
        "bf1": jnp.zeros((1, HIDDEN), jnp.float32),
        "w2": jax.random.normal(keys[5], (EMBED, HIDDEN), jnp.float32) * s,
        "bf2": jnp.zeros((1, EMBED), jnp.float32),
    }
    return params


if __name__ == "__main__":
    # TODO(synk): dropout is omitted (identity / eval mode); training-time
    # stochastic dropout would need pltpu.prng_* inside the kernel.
    root = jax.random.PRNGKey(0)
    k_in, k_par = jax.random.split(root)
    kv, kk, kq = jax.random.split(k_in, 3)

    value = jax.random.normal(kv, (BATCH, SEQ, EMBED), jnp.float32)
    key = jax.random.normal(kk, (BATCH, SEQ, EMBED), jnp.float32)
    query = jax.random.normal(kq, (BATCH, SEQ, EMBED), jnp.float32)
    params = init_params(k_par)

    out = transformer_block(value, key, query, params)
    out = jax.block_until_ready(out)

    ref = reference(value, key, query, params)
    # Tolerance 1e-3: pl.reciprocal(approx=True) in the softmax introduces a
    # ~1e-4 relative error on the denominator; everything else is exact f32.
    np.testing.assert_allclose(np.asarray(out), np.asarray(ref),
                               rtol=1e-3, atol=1e-3)
    print("KERNEL_OK")
</pallas_src>

<mosaic_0001>
module attributes {stable_mosaic.version = 11 : i64} {
  func.func @transformer_block_kernel(%arg0: memref<16x32xf32, #tpu.memory_space<vmem>>, %arg1: memref<16x32xf32, #tpu.memory_space<vmem>>, %arg2: memref<16x32xf32, #tpu.memory_space<vmem>>, %arg3: memref<4x32x8xf32, #tpu.memory_space<vmem>>, %arg4: memref<4x32x8xf32, #tpu.memory_space<vmem>>, %arg5: memref<4x32x8xf32, #tpu.memory_space<vmem>>, %arg6: memref<4x8x32xf32, #tpu.memory_space<vmem>>, %arg7: memref<1x32xf32, #tpu.memory_space<vmem>>, %arg8: memref<1x32xf32, #tpu.memory_space<vmem>>, %arg9: memref<1x32xf32, #tpu.memory_space<vmem>>, %arg10: memref<1x32xf32, #tpu.memory_space<vmem>>, %arg11: memref<1x32xf32, #tpu.memory_space<vmem>>, %arg12: memref<32x64xf32, #tpu.memory_space<vmem>>, %arg13: memref<1x64xf32, #tpu.memory_space<vmem>>, %arg14: memref<64x32xf32, #tpu.memory_space<vmem>>, %arg15: memref<1x32xf32, #tpu.memory_space<vmem>>, %arg16: memref<16x32xf32, #tpu.memory_space<vmem>>) attributes {dimension_semantics = [], scalar_prefetch = 0 : i64, scratch_operands = 0 : i64, tpu.core_type = #tpu.core_type<tc>} {
    %c0 = arith.constant 0 : index
    %c0_0 = arith.constant 0 : index
    %0 = vector.load %arg0[%c0, %c0_0] : memref<16x32xf32, #tpu.memory_space<vmem>>, vector<16x32xf32>
    %c0_1 = arith.constant 0 : index
    %c0_2 = arith.constant 0 : index
    %1 = vector.load %arg1[%c0_1, %c0_2] : memref<16x32xf32, #tpu.memory_space<vmem>>, vector<16x32xf32>
    %c0_3 = arith.constant 0 : index
    %c0_4 = arith.constant 0 : index
    %2 = vector.load %arg2[%c0_3, %c0_4] : memref<16x32xf32, #tpu.memory_space<vmem>>, vector<16x32xf32>
    %c0_5 = arith.constant 0 : index
    %c0_6 = arith.constant 0 : index
    %3 = vector.load %arg7[%c0_5, %c0_6] : memref<1x32xf32, #tpu.memory_space<vmem>>, vector<1x32xf32>
    %4 = vector.broadcast %3 : vector<1x32xf32> to vector<16x32xf32>
    %5 = arith.addf %2, %4 : vector<16x32xf32>
    %c0_7 = arith.constant 0 : index
    %c0_8 = arith.constant 0 : index
    %c0_9 = arith.constant 0 : index
    %6 = vector.load %arg5[%c0_7, %c0_8, %c0_9] : memref<4x32x8xf32, #tpu.memory_space<vmem>>, vector<1x32x8xf32>
    %7 = vector.shape_cast %6 : vector<1x32x8xf32> to vector<32x8xf32>
    %cst = arith.constant dense<0.000000e+00> : vector<16x8xf32>
    %8 = tpu.matmul %2, %7, %cst {dimension_numbers = #tpu.dot_dimension_numbers<[1], [0], [0], [1], [0, 0, 1, 1], [], []>} : vector<16x32xf32>, vector<32x8xf32>, vector<16x8xf32> -> vector<16x8xf32>
    %c0_10 = arith.constant 0 : index
    %c0_11 = arith.constant 0 : index
    %c0_12 = arith.constant 0 : index
    %9 = vector.load %arg4[%c0_10, %c0_11, %c0_12] : memref<4x32x8xf32, #tpu.memory_space<vmem>>, vector<1x32x8xf32>
    %10 = vector.shape_cast %9 : vector<1x32x8xf32> to vector<32x8xf32>
    %cst_13 = arith.constant dense<0.000000e+00> : vector<16x8xf32>
    %11 = tpu.matmul %1, %10, %cst_13 {dimension_numbers = #tpu.dot_dimension_numbers<[1], [0], [0], [1], [0, 0, 1, 1], [], []>} : vector<16x32xf32>, vector<32x8xf32>, vector<16x8xf32> -> vector<16x8xf32>
    %c0_14 = arith.constant 0 : index
    %c0_15 = arith.constant 0 : index
    %c0_16 = arith.constant 0 : index
    %12 = vector.load %arg3[%c0_14, %c0_15, %c0_16] : memref<4x32x8xf32, #tpu.memory_space<vmem>>, vector<1x32x8xf32>
    %13 = vector.shape_cast %12 : vector<1x32x8xf32> to vector<32x8xf32>
    %cst_17 = arith.constant dense<0.000000e+00> : vector<16x8xf32>
    %14 = tpu.matmul %0, %13, %cst_17 {dimension_numbers = #tpu.dot_dimension_numbers<[1], [0], [0], [1], [0, 0, 1, 1], [], []>} : vector<16x32xf32>, vector<32x8xf32>, vector<16x8xf32> -> vector<16x8xf32>
    %15 = vector.shape_cast %8 : vector<16x8xf32> to vector<2x8x8xf32>
    %16 = vector.shape_cast %11 : vector<16x8xf32> to vector<2x8x8xf32>
    %17 = vector.shape_cast %14 : vector<16x8xf32> to vector<2x8x8xf32>
    "tpu.trace_start"() <{level = 10 : i32, message = "nqd,nkd->nqk"}> : () -> ()
    %cst_18 = arith.constant dense<0.000000e+00> : vector<2x8x8xf32>
    %18 = tpu.matmul %15, %16, %cst_18 {dimension_numbers = #tpu.dot_dimension_numbers<[2], [2], [1], [1], [0, 0, 0, 1, 1, 1], [0], [0]>} : vector<2x8x8xf32>, vector<2x8x8xf32>, vector<2x8x8xf32> -> vector<2x8x8xf32>
    "tpu.trace_stop"() : () -> ()
    %cst_19 = arith.constant dense<0xFF800000> : vector<2x8xf32>
    %19 = vector.multi_reduction <maximumf>, %18, %cst_19 [2] : vector<2x8x8xf32> to vector<2x8xf32>
    %20 = vector.shape_cast %19 : vector<2x8xf32> to vector<2x8x1xf32>
    %21 = vector.broadcast %20 : vector<2x8x1xf32> to vector<2x8x8xf32>
    %22 = arith.subf %18, %21 : vector<2x8x8xf32>
    %23 = math.exp %22 : vector<2x8x8xf32>
    %cst_20 = arith.constant dense<0.000000e+00> : vector<2x8xf32>
    %24 = vector.multi_reduction <add>, %23, %cst_20 [2] : vector<2x8x8xf32> to vector<2x8xf32>
    %25 = vector.shape_cast %24 : vector<2x8xf32> to vector<2x8x1xf32>
    %26 = tpu.reciprocal %25 {approx = true} : vector<2x8x1xf32> -> vector<2x8x1xf32>
    %27 = vector.broadcast %26 : vector<2x8x1xf32> to vector<2x8x8xf32>
    %28 = arith.mulf %23, %27 : vector<2x8x8xf32>
    "tpu.trace_start"() <{level = 10 : i32, message = "nqk,nkd->nqd"}> : () -> ()
    %cst_21 = arith.constant dense<0.000000e+00> : vector<2x8x8xf32>
    %29 = tpu.matmul %28, %17, %cst_21 {dimension_numbers = #tpu.dot_dimension_numbers<[2], [1], [1], [2], [0, 0, 0, 1, 1, 2], [0], [0]>} : vector<2x8x8xf32>, vector<2x8x8xf32>, vector<2x8x8xf32> -> vector<2x8x8xf32>
    "tpu.trace_stop"() : () -> ()
    %30 = vector.shape_cast %29 : vector<2x8x8xf32> to vector<16x8xf32>
    %c0_22 = arith.constant 0 : index
    %c0_23 = arith.constant 0 : index
    %c0_24 = arith.constant 0 : index
    %31 = vector.load %arg6[%c0_22, %c0_23, %c0_24] : memref<4x8x32xf32, #tpu.memory_space<vmem>>, vector<1x8x32xf32>
    %32 = vector.shape_cast %31 : vector<1x8x32xf32> to vector<8x32xf32>
    %cst_25 = arith.constant dense<0.000000e+00> : vector<16x32xf32>
    %33 = tpu.matmul %30, %32, %cst_25 {dimension_numbers = #tpu.dot_dimension_numbers<[1], [0], [0], [1], [0, 0, 1, 1], [], []>} : vector<16x8xf32>, vector<8x32xf32>, vector<16x32xf32> -> vector<16x32xf32>
    %34 = arith.addf %5, %33 : vector<16x32xf32>
    %c1 = arith.constant 1 : index
    %c0_26 = arith.constant 0 : index
    %c0_27 = arith.constant 0 : index
    %35 = vector.load %arg5[%c1, %c0_26, %c0_27] : memref<4x32x8xf32, #tpu.memory_space<vmem>>, vector<1x32x8xf32>
    %36 = vector.shape_cast %35 : vector<1x32x8xf32> to vector<32x8xf32>
    %cst_28 = arith.constant dense<0.000000e+00> : vector<16x8xf32>
    %37 = tpu.matmul %2, %36, %cst_28 {dimension_numbers = #tpu.dot_dimension_numbers<[1], [0], [0], [1], [0, 0, 1, 1], [], []>} : vector<16x32xf32>, vector<32x8xf32>, vector<16x8xf32> -> vector<16x8xf32>
    %c1_29 = arith.constant 1 : index
    %c0_30 = arith.constant 0 : index
    %c0_31 = arith.constant 0 : index
    %38 = vector.load %arg4[%c1_29, %c0_30, %c0_31] : memref<4x32x8xf32, #tpu.memory_space<vmem>>, vector<1x32x8xf32>
    %39 = vector.shape_cast %38 : vector<1x32x8xf32> to vector<32x8xf32>
    %cst_32 = arith.constant dense<0.000000e+00> : vector<16x8xf32>
    %40 = tpu.matmul %1, %39, %cst_32 {dimension_numbers = #tpu.dot_dimension_numbers<[1], [0], [0], [1], [0, 0, 1, 1], [], []>} : vector<16x32xf32>, vector<32x8xf32>, vector<16x8xf32> -> vector<16x8xf32>
    %c1_33 = arith.constant 1 : index
    %c0_34 = arith.constant 0 : index
    %c0_35 = arith.constant 0 : index
    %41 = vector.load %arg3[%c1_33, %c0_34, %c0_35] : memref<4x32x8xf32, #tpu.memory_space<vmem>>, vector<1x32x8xf32>
    %42 = vector.shape_cast %41 : vector<1x32x8xf32> to vector<32x8xf32>
    %cst_36 = arith.constant dense<0.000000e+00> : vector<16x8xf32>
    %43 = tpu.matmul %0, %42, %cst_36 {dimension_numbers = #tpu.dot_dimension_numbers<[1], [0], [0], [1], [0, 0, 1, 1], [], []>} : vector<16x32xf32>, vector<32x8xf32>, vector<16x8xf32> -> vector<16x8xf32>
    %44 = vector.shape_cast %37 : vector<16x8xf32> to vector<2x8x8xf32>
    %45 = vector.shape_cast %40 : vector<16x8xf32> to vector<2x8x8xf32>
    %46 = vector.shape_cast %43 : vector<16x8xf32> to vector<2x8x8xf32>
    "tpu.trace_start"() <{level = 10 : i32, message = "nqd,nkd->nqk"}> : () -> ()
    %cst_37 = arith.constant dense<0.000000e+00> : vector<2x8x8xf32>
    %47 = tpu.matmul %44, %45, %cst_37 {dimension_numbers = #tpu.dot_dimension_numbers<[2], [2], [1], [1], [0, 0, 0, 1, 1, 1], [0], [0]>} : vector<2x8x8xf32>, vector<2x8x8xf32>, vector<2x8x8xf32> -> vector<2x8x8xf32>
    "tpu.trace_stop"() : () -> ()
    %cst_38 = arith.constant dense<0xFF800000> : vector<2x8xf32>
    %48 = vector.multi_reduction <maximumf>, %47, %cst_38 [2] : vector<2x8x8xf32> to vector<2x8xf32>
    %49 = vector.shape_cast %48 : vector<2x8xf32> to vector<2x8x1xf32>
    %50 = vector.broadcast %49 : vector<2x8x1xf32> to vector<2x8x8xf32>
    %51 = arith.subf %47, %50 : vector<2x8x8xf32>
    %52 = math.exp %51 : vector<2x8x8xf32>
    %cst_39 = arith.constant dense<0.000000e+00> : vector<2x8xf32>
    %53 = vector.multi_reduction <add>, %52, %cst_39 [2] : vector<2x8x8xf32> to vector<2x8xf32>
    %54 = vector.shape_cast %53 : vector<2x8xf32> to vector<2x8x1xf32>
    %55 = tpu.reciprocal %54 {approx = true} : vector<2x8x1xf32> -> vector<2x8x1xf32>
    %56 = vector.broadcast %55 : vector<2x8x1xf32> to vector<2x8x8xf32>
    %57 = arith.mulf %52, %56 : vector<2x8x8xf32>
    "tpu.trace_start"() <{level = 10 : i32, message = "nqk,nkd->nqd"}> : () -> ()
    %cst_40 = arith.constant dense<0.000000e+00> : vector<2x8x8xf32>
    %58 = tpu.matmul %57, %46, %cst_40 {dimension_numbers = #tpu.dot_dimension_numbers<[2], [1], [1], [2], [0, 0, 0, 1, 1, 2], [0], [0]>} : vector<2x8x8xf32>, vector<2x8x8xf32>, vector<2x8x8xf32> -> vector<2x8x8xf32>
    "tpu.trace_stop"() : () -> ()
    %59 = vector.shape_cast %58 : vector<2x8x8xf32> to vector<16x8xf32>
    %c1_41 = arith.constant 1 : index
    %c0_42 = arith.constant 0 : index
    %c0_43 = arith.constant 0 : index
    %60 = vector.load %arg6[%c1_41, %c0_42, %c0_43] : memref<4x8x32xf32, #tpu.memory_space<vmem>>, vector<1x8x32xf32>
    %61 = vector.shape_cast %60 : vector<1x8x32xf32> to vector<8x32xf32>
    %cst_44 = arith.constant dense<0.000000e+00> : vector<16x32xf32>
    %62 = tpu.matmul %59, %61, %cst_44 {dimension_numbers = #tpu.dot_dimension_numbers<[1], [0], [0], [1], [0, 0, 1, 1], [], []>} : vector<16x8xf32>, vector<8x32xf32>, vector<16x32xf32> -> vector<16x32xf32>
    %63 = arith.addf %34, %62 : vector<16x32xf32>
    %c2 = arith.constant 2 : index
    %c0_45 = arith.constant 0 : index
    %c0_46 = arith.constant 0 : index
    %64 = vector.load %arg5[%c2, %c0_45, %c0_46] : memref<4x32x8xf32, #tpu.memory_space<vmem>>, vector<1x32x8xf32>
    %65 = vector.shape_cast %64 : vector<1x32x8xf32> to vector<32x8xf32>
    %cst_47 = arith.constant dense<0.000000e+00> : vector<16x8xf32>
    %66 = tpu.matmul %2, %65, %cst_47 {dimension_numbers = #tpu.dot_dimension_numbers<[1], [0], [0], [1], [0, 0, 1, 1], [], []>} : vector<16x32xf32>, vector<32x8xf32>, vector<16x8xf32> -> vector<16x8xf32>
    %c2_48 = arith.constant 2 : index
    %c0_49 = arith.constant 0 : index
    %c0_50 = arith.constant 0 : index
    %67 = vector.load %arg4[%c2_48, %c0_49, %c0_50] : memref<4x32x8xf32, #tpu.memory_space<vmem>>, vector<1x32x8xf32>
    %68 = vector.shape_cast %67 : vector<1x32x8xf32> to vector<32x8xf32>
    %cst_51 = arith.constant dense<0.000000e+00> : vector<16x8xf32>
    %69 = tpu.matmul %1, %68, %cst_51 {dimension_numbers = #tpu.dot_dimension_numbers<[1], [0], [0], [1], [0, 0, 1, 1], [], []>} : vector<16x32xf32>, vector<32x8xf32>, vector<16x8xf32> -> vector<16x8xf32>
    %c2_52 = arith.constant 2 : index
    %c0_53 = arith.constant 0 : index
    %c0_54 = arith.constant 0 : index
    %70 = vector.load %arg3[%c2_52, %c0_53, %c0_54] : memref<4x32x8xf32, #tpu.memory_space<vmem>>, vector<1x32x8xf32>
    %71 = vector.shape_cast %70 : vector<1x32x8xf32> to vector<32x8xf32>
    %cst_55 = arith.constant dense<0.000000e+00> : vector<16x8xf32>
    %72 = tpu.matmul %0, %71, %cst_55 {dimension_numbers = #tpu.dot_dimension_numbers<[1], [0], [0], [1], [0, 0, 1, 1], [], []>} : vector<16x32xf32>, vector<32x8xf32>, vector<16x8xf32> -> vector<16x8xf32>
    %73 = vector.shape_cast %66 : vector<16x8xf32> to vector<2x8x8xf32>
    %74 = vector.shape_cast %69 : vector<16x8xf32> to vector<2x8x8xf32>
    %75 = vector.shape_cast %72 : vector<16x8xf32> to vector<2x8x8xf32>
    "tpu.trace_start"() <{level = 10 : i32, message = "nqd,nkd->nqk"}> : () -> ()
    %cst_56 = arith.constant dense<0.000000e+00> : vector<2x8x8xf32>
    %76 = tpu.matmul %73, %74, %cst_56 {dimension_numbers = #tpu.dot_dimension_numbers<[2], [2], [1], [1], [0, 0, 0, 1, 1, 1], [0], [0]>} : vector<2x8x8xf32>, vector<2x8x8xf32>, vector<2x8x8xf32> -> vector<2x8x8xf32>
    "tpu.trace_stop"() : () -> ()
    %cst_57 = arith.constant dense<0xFF800000> : vector<2x8xf32>
    %77 = vector.multi_reduction <maximumf>, %76, %cst_57 [2] : vector<2x8x8xf32> to vector<2x8xf32>
    %78 = vector.shape_cast %77 : vector<2x8xf32> to vector<2x8x1xf32>
    %79 = vector.broadcast %78 : vector<2x8x1xf32> to vector<2x8x8xf32>
    %80 = arith.subf %76, %79 : vector<2x8x8xf32>
    %81 = math.exp %80 : vector<2x8x8xf32>
    %cst_58 = arith.constant dense<0.000000e+00> : vector<2x8xf32>
    %82 = vector.multi_reduction <add>, %81, %cst_58 [2] : vector<2x8x8xf32> to vector<2x8xf32>
    %83 = vector.shape_cast %82 : vector<2x8xf32> to vector<2x8x1xf32>
    %84 = tpu.reciprocal %83 {approx = true} : vector<2x8x1xf32> -> vector<2x8x1xf32>
    %85 = vector.broadcast %84 : vector<2x8x1xf32> to vector<2x8x8xf32>
    %86 = arith.mulf %81, %85 : vector<2x8x8xf32>
    "tpu.trace_start"() <{level = 10 : i32, message = "nqk,nkd->nqd"}> : () -> ()
    %cst_59 = arith.constant dense<0.000000e+00> : vector<2x8x8xf32>
    %87 = tpu.matmul %86, %75, %cst_59 {dimension_numbers = #tpu.dot_dimension_numbers<[2], [1], [1], [2], [0, 0, 0, 1, 1, 2], [0], [0]>} : vector<2x8x8xf32>, vector<2x8x8xf32>, vector<2x8x8xf32> -> vector<2x8x8xf32>
    "tpu.trace_stop"() : () -> ()
    %88 = vector.shape_cast %87 : vector<2x8x8xf32> to vector<16x8xf32>
    %c2_60 = arith.constant 2 : index
    %c0_61 = arith.constant 0 : index
    %c0_62 = arith.constant 0 : index
    %89 = vector.load %arg6[%c2_60, %c0_61, %c0_62] : memref<4x8x32xf32, #tpu.memory_space<vmem>>, vector<1x8x32xf32>
    %90 = vector.shape_cast %89 : vector<1x8x32xf32> to vector<8x32xf32>
    %cst_63 = arith.constant dense<0.000000e+00> : vector<16x32xf32>
    %91 = tpu.matmul %88, %90, %cst_63 {dimension_numbers = #tpu.dot_dimension_numbers<[1], [0], [0], [1], [0, 0, 1, 1], [], []>} : vector<16x8xf32>, vector<8x32xf32>, vector<16x32xf32> -> vector<16x32xf32>
    %92 = arith.addf %63, %91 : vector<16x32xf32>
    %c3 = arith.constant 3 : index
    %c0_64 = arith.constant 0 : index
    %c0_65 = arith.constant 0 : index
    %93 = vector.load %arg5[%c3, %c0_64, %c0_65] : memref<4x32x8xf32, #tpu.memory_space<vmem>>, vector<1x32x8xf32>
    %94 = vector.shape_cast %93 : vector<1x32x8xf32> to vector<32x8xf32>
    %cst_66 = arith.constant dense<0.000000e+00> : vector<16x8xf32>
    %95 = tpu.matmul %2, %94, %cst_66 {dimension_numbers = #tpu.dot_dimension_numbers<[1], [0], [0], [1], [0, 0, 1, 1], [], []>} : vector<16x32xf32>, vector<32x8xf32>, vector<16x8xf32> -> vector<16x8xf32>
    %c3_67 = arith.constant 3 : index
    %c0_68 = arith.constant 0 : index
    %c0_69 = arith.constant 0 : index
    %96 = vector.load %arg4[%c3_67, %c0_68, %c0_69] : memref<4x32x8xf32, #tpu.memory_space<vmem>>, vector<1x32x8xf32>
    %97 = vector.shape_cast %96 : vector<1x32x8xf32> to vector<32x8xf32>
    %cst_70 = arith.constant dense<0.000000e+00> : vector<16x8xf32>
    %98 = tpu.matmul %1, %97, %cst_70 {dimension_numbers = #tpu.dot_dimension_numbers<[1], [0], [0], [1], [0, 0, 1, 1], [], []>} : vector<16x32xf32>, vector<32x8xf32>, vector<16x8xf32> -> vector<16x8xf32>
    %c3_71 = arith.constant 3 : index
    %c0_72 = arith.constant 0 : index
    %c0_73 = arith.constant 0 : index
    %99 = vector.load %arg3[%c3_71, %c0_72, %c0_73] : memref<4x32x8xf32, #tpu.memory_space<vmem>>, vector<1x32x8xf32>
    %100 = vector.shape_cast %99 : vector<1x32x8xf32> to vector<32x8xf32>
    %cst_74 = arith.constant dense<0.000000e+00> : vector<16x8xf32>
    %101 = tpu.matmul %0, %100, %cst_74 {dimension_numbers = #tpu.dot_dimension_numbers<[1], [0], [0], [1], [0, 0, 1, 1], [], []>} : vector<16x32xf32>, vector<32x8xf32>, vector<16x8xf32> -> vector<16x8xf32>
    %102 = vector.shape_cast %95 : vector<16x8xf32> to vector<2x8x8xf32>
    %103 = vector.shape_cast %98 : vector<16x8xf32> to vector<2x8x8xf32>
    %104 = vector.shape_cast %101 : vector<16x8xf32> to vector<2x8x8xf32>
    "tpu.trace_start"() <{level = 10 : i32, message = "nqd,nkd->nqk"}> : () -> ()
    %cst_75 = arith.constant dense<0.000000e+00> : vector<2x8x8xf32>
    %105 = tpu.matmul %102, %103, %cst_75 {dimension_numbers = #tpu.dot_dimension_numbers<[2], [2], [1], [1], [0, 0, 0, 1, 1, 1], [0], [0]>} : vector<2x8x8xf32>, vector<2x8x8xf32>, vector<2x8x8xf32> -> vector<2x8x8xf32>
    "tpu.trace_stop"() : () -> ()
    %cst_76 = arith.constant dense<0xFF800000> : vector<2x8xf32>
    %106 = vector.multi_reduction <maximumf>, %105, %cst_76 [2] : vector<2x8x8xf32> to vector<2x8xf32>
    %107 = vector.shape_cast %106 : vector<2x8xf32> to vector<2x8x1xf32>
    %108 = vector.broadcast %107 : vector<2x8x1xf32> to vector<2x8x8xf32>
    %109 = arith.subf %105, %108 : vector<2x8x8xf32>
    %110 = math.exp %109 : vector<2x8x8xf32>
    %cst_77 = arith.constant dense<0.000000e+00> : vector<2x8xf32>
    %111 = vector.multi_reduction <add>, %110, %cst_77 [2] : vector<2x8x8xf32> to vector<2x8xf32>
    %112 = vector.shape_cast %111 : vector<2x8xf32> to vector<2x8x1xf32>
    %113 = tpu.reciprocal %112 {approx = true} : vector<2x8x1xf32> -> vector<2x8x1xf32>
    %114 = vector.broadcast %113 : vector<2x8x1xf32> to vector<2x8x8xf32>
    %115 = arith.mulf %110, %114 : vector<2x8x8xf32>
    "tpu.trace_start"() <{level = 10 : i32, message = "nqk,nkd->nqd"}> : () -> ()
    %cst_78 = arith.constant dense<0.000000e+00> : vector<2x8x8xf32>
    %116 = tpu.matmul %115, %104, %cst_78 {dimension_numbers = #tpu.dot_dimension_numbers<[2], [1], [1], [2], [0, 0, 0, 1, 1, 2], [0], [0]>} : vector<2x8x8xf32>, vector<2x8x8xf32>, vector<2x8x8xf32> -> vector<2x8x8xf32>
    "tpu.trace_stop"() : () -> ()
    %117 = vector.shape_cast %116 : vector<2x8x8xf32> to vector<16x8xf32>
    %c3_79 = arith.constant 3 : index
    %c0_80 = arith.constant 0 : index
    %c0_81 = arith.constant 0 : index
    %118 = vector.load %arg6[%c3_79, %c0_80, %c0_81] : memref<4x8x32xf32, #tpu.memory_space<vmem>>, vector<1x8x32xf32>
    %119 = vector.shape_cast %118 : vector<1x8x32xf32> to vector<8x32xf32>
    %cst_82 = arith.constant dense<0.000000e+00> : vector<16x32xf32>
    %120 = tpu.matmul %117, %119, %cst_82 {dimension_numbers = #tpu.dot_dimension_numbers<[1], [0], [0], [1], [0, 0, 1, 1], [], []>} : vector<16x8xf32>, vector<8x32xf32>, vector<16x32xf32> -> vector<16x32xf32>
    %121 = arith.addf %92, %120 : vector<16x32xf32>
    %c0_83 = arith.constant 0 : index
    %c0_84 = arith.constant 0 : index
    %122 = vector.load %arg8[%c0_83, %c0_84] : memref<1x32xf32, #tpu.memory_space<vmem>>, vector<1x32xf32>
    %c0_85 = arith.constant 0 : index
    %c0_86 = arith.constant 0 : index
    %123 = vector.load %arg9[%c0_85, %c0_86] : memref<1x32xf32, #tpu.memory_space<vmem>>, vector<1x32xf32>
    %cst_87 = arith.constant dense<0.000000e+00> : vector<16xf32>
    %124 = vector.multi_reduction <add>, %121, %cst_87 [1] : vector<16x32xf32> to vector<16xf32>
    %125 = vector.shape_cast %124 : vector<16xf32> to vector<16x1xf32>
    %cst_88 = arith.constant 3.200000e+01 : f32
    %126 = vector.broadcast %cst_88 : f32 to vector<16x1xf32>
    %127 = arith.divf %125, %126 : vector<16x1xf32>
    %128 = vector.broadcast %127 : vector<16x1xf32> to vector<16x32xf32>
    %129 = arith.subf %121, %128 : vector<16x32xf32>
    %130 = arith.mulf %129, %129 : vector<16x32xf32>
    %cst_89 = arith.constant dense<0.000000e+00> : vector<16xf32>
    %131 = vector.multi_reduction <add>, %130, %cst_89 [1] : vector<16x32xf32> to vector<16xf32>
    %132 = vector.shape_cast %131 : vector<16xf32> to vector<16x1xf32>
    %cst_90 = arith.constant 3.200000e+01 : f32
    %133 = vector.broadcast %cst_90 : f32 to vector<16x1xf32>
    %134 = arith.divf %132, %133 : vector<16x1xf32>
    %cst_91 = arith.constant 9.99999974E-6 : f32
    %135 = vector.broadcast %cst_91 : f32 to vector<16x1xf32>
    %136 = arith.addf %134, %135 : vector<16x1xf32>
    %137 = math.rsqrt %136 : vector<16x1xf32>
    %138 = vector.broadcast %127 : vector<16x1xf32> to vector<16x32xf32>
    %139 = arith.subf %121, %138 : vector<16x32xf32>
    %140 = vector.broadcast %137 : vector<16x1xf32> to vector<16x32xf32>
    %141 = arith.mulf %139, %140 : vector<16x32xf32>
    %142 = vector.broadcast %122 : vector<1x32xf32> to vector<16x32xf32>
    %143 = arith.mulf %141, %142 : vector<16x32xf32>
    %144 = vector.broadcast %123 : vector<1x32xf32> to vector<16x32xf32>
    %145 = arith.addf %143, %144 : vector<16x32xf32>
    %c0_92 = arith.constant 0 : index
    %c0_93 = arith.constant 0 : index
    %146 = vector.load %arg12[%c0_92, %c0_93] : memref<32x64xf32, #tpu.memory_space<vmem>>, vector<32x64xf32>
    %cst_94 = arith.constant dense<0.000000e+00> : vector<16x64xf32>
    %147 = tpu.matmul %145, %146, %cst_94 {dimension_numbers = #tpu.dot_dimension_numbers<[1], [0], [0], [1], [0, 0, 1, 1], [], []>} : vector<16x32xf32>, vector<32x64xf32>, vector<16x64xf32> -> vector<16x64xf32>
    %c0_95 = arith.constant 0 : index
    %c0_96 = arith.constant 0 : index
    %148 = vector.load %arg13[%c0_95, %c0_96] : memref<1x64xf32, #tpu.memory_space<vmem>>, vector<1x64xf32>
    %149 = vector.broadcast %148 : vector<1x64xf32> to vector<16x64xf32>
    %150 = arith.addf %147, %149 : vector<16x64xf32>
    %cst_97 = arith.constant 0.000000e+00 : f32
    %151 = vector.broadcast %cst_97 : f32 to vector<16x64xf32>
    %152 = arith.maximumf %150, %151 : vector<16x64xf32>
    %c0_98 = arith.constant 0 : index
    %c0_99 = arith.constant 0 : index
    %153 = vector.load %arg14[%c0_98, %c0_99] : memref<64x32xf32, #tpu.memory_space<vmem>>, vector<64x32xf32>
    %cst_100 = arith.constant dense<0.000000e+00> : vector<16x32xf32>
    %154 = tpu.matmul %152, %153, %cst_100 {dimension_numbers = #tpu.dot_dimension_numbers<[1], [0], [0], [1], [0, 0, 1, 1], [], []>} : vector<16x64xf32>, vector<64x32xf32>, vector<16x32xf32> -> vector<16x32xf32>
    %c0_101 = arith.constant 0 : index
    %c0_102 = arith.constant 0 : index
    %155 = vector.load %arg15[%c0_101, %c0_102] : memref<1x32xf32, #tpu.memory_space<vmem>>, vector<1x32xf32>
    %156 = vector.broadcast %155 : vector<1x32xf32> to vector<16x32xf32>
    %157 = arith.addf %154, %156 : vector<16x32xf32>
    %158 = arith.addf %157, %145 : vector<16x32xf32>
    %c0_103 = arith.constant 0 : index
    %c0_104 = arith.constant 0 : index
    %159 = vector.load %arg10[%c0_103, %c0_104] : memref<1x32xf32, #tpu.memory_space<vmem>>, vector<1x32xf32>
    %c0_105 = arith.constant 0 : index
    %c0_106 = arith.constant 0 : index
    %160 = vector.load %arg11[%c0_105, %c0_106] : memref<1x32xf32, #tpu.memory_space<vmem>>, vector<1x32xf32>
    %cst_107 = arith.constant dense<0.000000e+00> : vector<16xf32>
    %161 = vector.multi_reduction <add>, %158, %cst_107 [1] : vector<16x32xf32> to vector<16xf32>
    %162 = vector.shape_cast %161 : vector<16xf32> to vector<16x1xf32>
    %cst_108 = arith.constant 3.200000e+01 : f32
    %163 = vector.broadcast %cst_108 : f32 to vector<16x1xf32>
    %164 = arith.divf %162, %163 : vector<16x1xf32>
    %165 = vector.broadcast %164 : vector<16x1xf32> to vector<16x32xf32>
    %166 = arith.subf %158, %165 : vector<16x32xf32>
    %167 = arith.mulf %166, %166 : vector<16x32xf32>
    %cst_109 = arith.constant dense<0.000000e+00> : vector<16xf32>
    %168 = vector.multi_reduction <add>, %167, %cst_109 [1] : vector<16x32xf32> to vector<16xf32>
    %169 = vector.shape_cast %168 : vector<16xf32> to vector<16x1xf32>
    %cst_110 = arith.constant 3.200000e+01 : f32
    %170 = vector.broadcast %cst_110 : f32 to vector<16x1xf32>
    %171 = arith.divf %169, %170 : vector<16x1xf32>
    %cst_111 = arith.constant 9.99999974E-6 : f32
    %172 = vector.broadcast %cst_111 : f32 to vector<16x1xf32>
    %173 = arith.addf %171, %172 : vector<16x1xf32>
    %174 = math.rsqrt %173 : vector<16x1xf32>
    %175 = vector.broadcast %164 : vector<16x1xf32> to vector<16x32xf32>
    %176 = arith.subf %158, %175 : vector<16x32xf32>
    %177 = vector.broadcast %174 : vector<16x1xf32> to vector<16x32xf32>
    %178 = arith.mulf %176, %177 : vector<16x32xf32>
    %179 = vector.broadcast %159 : vector<1x32xf32> to vector<16x32xf32>
    %180 = arith.mulf %178, %179 : vector<16x32xf32>
    %181 = vector.broadcast %160 : vector<1x32xf32> to vector<16x32xf32>
    %182 = arith.addf %180, %181 : vector<16x32xf32>
    %c0_112 = arith.constant 0 : index
    %c0_113 = arith.constant 0 : index
    %183 = vector.load %arg16[%c0_112, %c0_113] : memref<16x32xf32, #tpu.memory_space<vmem>>, vector<16x32xf32>
    tpu.vector_store %arg16[%c0_112, %c0_113], %182 {strides = array<i32>} : memref<16x32xf32, #tpu.memory_space<vmem>>, vector<16x32xf32>,
    return
  }
}

</mosaic_0001>

<llo_original>
// kernel: tpu_custom_call.1
$region0: #{tpu_custom_call.1}
  #allocation0 [shape = 'u32[]', space=smem, size = 0x4, offset = 0x4, fixed_abs, tag = 'smem constant byte address 0x4 - core index']
  #allocation1 [shape = 'u32[72,128]{1,0:T(1,128)}', space=vmem, size = 0x9000, scoped, tag = 'internal scratch']
  %s0 = inlined_call_operand.vmem [shape: f32[16,32], index: 0, kind: input, shape index: {}]
  %s1 = inlined_call_operand.vmem [shape: f32[16,32], index: 1, kind: input, shape index: {}]
  %s2 = inlined_call_operand.vmem [shape: f32[16,32], index: 2, kind: input, shape index: {}]
  %s3 = inlined_call_operand.vmem [shape: f32[4,32,8], index: 3, kind: input, shape index: {}]
  %s4 = inlined_call_operand.vmem [shape: f32[4,32,8], index: 4, kind: input, shape index: {}]
  %s5 = inlined_call_operand.vmem [shape: f32[4,32,8], index: 5, kind: input, shape index: {}]
  %s6 = inlined_call_operand.vmem [shape: f32[4,8,32], index: 6, kind: input, shape index: {}]
  %s7 = inlined_call_operand.vmem [shape: f32[1,32], index: 7, kind: input, shape index: {}]
  %s8 = inlined_call_operand.vmem [shape: f32[1,32], index: 8, kind: input, shape index: {}]
  %s9 = inlined_call_operand.vmem [shape: f32[1,32], index: 9, kind: input, shape index: {}]
  %s10 = inlined_call_operand.vmem [shape: f32[1,32], index: 10, kind: input, shape index: {}]
  %s11 = inlined_call_operand.vmem [shape: f32[1,32], index: 11, kind: input, shape index: {}]
  %s12 = inlined_call_operand.vmem [shape: f32[32,64], index: 12, kind: input, shape index: {}]
  %s13 = inlined_call_operand.vmem [shape: f32[1,64], index: 13, kind: input, shape index: {}]
  %s14 = inlined_call_operand.vmem [shape: f32[64,32], index: 14, kind: input, shape index: {}]
  %s15 = inlined_call_operand.vmem [shape: f32[1,32], index: 15, kind: input, shape index: {}]
  %s16 = inlined_call_operand.hbm [shape: f32[16,32], index: 16, kind: output, shape index: {}]
  %s17 = sld [smem:[#allocation0]]
  $region74: #{tpu_custom_call.1} parent=0
    _
  %s19 = ssub.s32 1, %s17
  %s20 = scalar_select 0, %s19, %s17
  $region1: #{tpu_custom_call.1} parent=0
    #allocation2 [shape = 'u8[8192]{0}', space=vmem, size = 0x2000, scoped, tag = 'output window, operand 0, single buffered']
    #allocation3 [shape = 's32[1]{0}', space=sflag, size = 0x4, scoped, tag = 'scoped memory for tpu_custom_call.1']
    %21 = vsyncpa [#allocation3], 0
    // Predicated region
    $region2: #{tpu_custom_call.1} parent=1 // pred_check
      _
    $region3: #{tpu_custom_call.1} parent=1 // pred_check_branch
      %23 = sbr.rel (0) target = $region5
    $region4: #{tpu_custom_call.1} parent=1 // pred_region
      _
    $region5: #{tpu_custom_call.1} parent=1 // pred_fallthru
      _
    // Predicated region
    $region6: #{tpu_custom_call.1} parent=1 // pred_check
      _
    $region7: #{tpu_custom_call.1} parent=1 // pred_check_branch
      %25 = sbr.rel (0) target = $region9
    $region8: #{tpu_custom_call.1} parent=1 // pred_region
      _
    $region9: #{tpu_custom_call.1} parent=1 // pred_fallthru
      _
    // Predicated region
    $region10: #{tpu_custom_call.1} parent=1 // pred_check
      _
    $region11: #{tpu_custom_call.1} parent=1 // pred_check_branch
      %27 = sbr.rel (0) target = $region13
    $region12: #{tpu_custom_call.1} parent=1 // pred_region
      _
    $region13: #{tpu_custom_call.1} parent=1 // pred_fallthru
      _
    // Predicated region
    $region14: #{tpu_custom_call.1} parent=1 // pred_check
      _
    $region15: #{tpu_custom_call.1} parent=1 // pred_check_branch
      %29 = sbr.rel (0) target = $region17
    $region16: #{tpu_custom_call.1} parent=1 // pred_region
      _
    $region17: #{tpu_custom_call.1} parent=1 // pred_fallthru
      _
    // Predicated region
    $region18: #{tpu_custom_call.1} parent=1 // pred_check
      _
    $region19: #{tpu_custom_call.1} parent=1 // pred_check_branch
      %31 = sbr.rel (0) target = $region21
    $region20: #{tpu_custom_call.1} parent=1 // pred_region
      _
    $region21: #{tpu_custom_call.1} parent=1 // pred_fallthru
      _
    // Predicated region
    $region22: #{tpu_custom_call.1} parent=1 // pred_check
      _
    $region23: #{tpu_custom_call.1} parent=1 // pred_check_branch
      %33 = sbr.rel (0) target = $region25
    $region24: #{tpu_custom_call.1} parent=1 // pred_region
      _
    $region25: #{tpu_custom_call.1} parent=1 // pred_fallthru
      _
    // Predicated region
    $region26: #{tpu_custom_call.1} parent=1 // pred_check
      _
    $region27: #{tpu_custom_call.1} parent=1 // pred_check_branch
      %35 = sbr.rel (0) target = $region29
    $region28: #{tpu_custom_call.1} parent=1 // pred_region
      _
    $region29: #{tpu_custom_call.1} parent=1 // pred_fallthru
      _
    // Predicated region
    $region30: #{tpu_custom_call.1} parent=1 // pred_check
      _
    $region31: #{tpu_custom_call.1} parent=1 // pred_check_branch
      %37 = sbr.rel (0) target = $region33
    $region32: #{tpu_custom_call.1} parent=1 // pred_region
      _
    $region33: #{tpu_custom_call.1} parent=1 // pred_fallthru
      _
    // Predicated region
    $region34: #{tpu_custom_call.1} parent=1 // pred_check
      _
    $region35: #{tpu_custom_call.1} parent=1 // pred_check_branch
      %39 = sbr.rel (0) target = $region37
    $region36: #{tpu_custom_call.1} parent=1 // pred_region
      _
    $region37: #{tpu_custom_call.1} parent=1 // pred_fallthru
      _
    // Predicated region
    $region38: #{tpu_custom_call.1} parent=1 // pred_check
      _
    $region39: #{tpu_custom_call.1} parent=1 // pred_check_branch
      %41 = sbr.rel (0) target = $region41
    $region40: #{tpu_custom_call.1} parent=1 // pred_region
      _
    $region41: #{tpu_custom_call.1} parent=1 // pred_fallthru
      _
    // Predicated region
    $region42: #{tpu_custom_call.1} parent=1 // pred_check
      _
    $region43: #{tpu_custom_call.1} parent=1 // pred_check_branch
      %43 = sbr.rel (0) target = $region45
    $region44: #{tpu_custom_call.1} parent=1 // pred_region
      _
    $region45: #{tpu_custom_call.1} parent=1 // pred_fallthru
      _
    // Predicated region
    $region46: #{tpu_custom_call.1} parent=1 // pred_check
      _
    $region47: #{tpu_custom_call.1} parent=1 // pred_check_branch
      %45 = sbr.rel (0) target = $region49
    $region48: #{tpu_custom_call.1} parent=1 // pred_region
      _
    $region49: #{tpu_custom_call.1} parent=1 // pred_fallthru
      _
    // Predicated region
    $region50: #{tpu_custom_call.1} parent=1 // pred_check
      _
    $region51: #{tpu_custom_call.1} parent=1 // pred_check_branch
      %47 = sbr.rel (0) target = $region53
    $region52: #{tpu_custom_call.1} parent=1 // pred_region
      _
    $region53: #{tpu_custom_call.1} parent=1 // pred_fallthru
      _
    // Predicated region
    $region54: #{tpu_custom_call.1} parent=1 // pred_check
      _
    $region55: #{tpu_custom_call.1} parent=1 // pred_check_branch
      %49 = sbr.rel (0) target = $region57
    $region56: #{tpu_custom_call.1} parent=1 // pred_region
      _
    $region57: #{tpu_custom_call.1} parent=1 // pred_fallthru
      _
    // Predicated region
    $region58: #{tpu_custom_call.1} parent=1 // pred_check
      _
    $region59: #{tpu_custom_call.1} parent=1 // pred_check_branch
      %51 = sbr.rel (0) target = $region61
    $region60: #{tpu_custom_call.1} parent=1 // pred_region
      _
    $region61: #{tpu_custom_call.1} parent=1 // pred_fallthru
      _
    // Predicated region
    $region62: #{tpu_custom_call.1} parent=1 // pred_check
      _
    $region63: #{tpu_custom_call.1} parent=1 // pred_check_branch
      %53 = sbr.rel (0) target = $region65
    $region64: #{tpu_custom_call.1} parent=1 // pred_region
      _
    $region65: #{tpu_custom_call.1} parent=1 // pred_fallthru
      _
    %v54 = vld [vmem:[%s0] sm:$0xff]
    %v55 = vld [vmem:[%s0 + $0x8] sm:$0xff]
    %v56 = vld [vmem:[%s1] sm:$0xff]
    %v57 = vld [vmem:[%s1 + $0x8] sm:$0xff]
    %v58 = vld [vmem:[%s2] sm:$0xff]
    %v59 = vld [vmem:[%s2 + $0x8] sm:$0xff]
    %v60 = vld [vmem:[%s7] sm:$0x1]
    %v62 = vperm.slane %v60, 0
    %v64 = vadd.f32 %v58, %v62
    %v65 = vadd.f32 %v59, %v62
    %v66 = vld [vmem:[%s5] sm:$0xff]
    %v67 = vld [vmem:[%s5 + $0x8] sm:$0xff]
    %v68 = vld [vmem:[%s5 + $0x10] sm:$0xff]
    %v69 = vld [vmem:[%s5 + $0x18] sm:$0xff]
    %vm70 = vcmask 261120
    %v72 = vsel %vm70, %v58, 0
    %v75 = vsel %vm70, %v59, 0
    %77 = vmatpush.msra.mxu0 0.0
    %78 = vmatpush.msra.mxu0 0.0
    %79 = vmatpush.msra.mxu0 0.0
    %80 = vmatpush.msra.mxu0 0.0
    %81 = vmatpush.msra.mxu0 0.0
    %82 = vmatpush.msra.mxu0 0.0
    %83 = vmatpush.msra.mxu0 0.0
    %84 = vmatpush.msra.mxu0 0.0
    %85 = vmatpush.msra.mxu0 0.0
    %86 = vmatpush.msra.mxu0 0.0
    %87 = vmatpush.msra.mxu0 0.0
    %88 = vmatpush.msra.mxu0 0.0
    %89 = vmatpush.msra.mxu0 %v69
    %90 = vmatpush.msra.mxu0 %v68
    %91 = vmatpush.msra.mxu0 %v67
    %92 = vmatpush.msra.mxu0 %v66
    %93 = vmatmul.f32.gmra.mxu0 %v72
    %v94 = vpop.f32.mrf.mxu0
    %v95 = vadd.f32 0.0, %v94
    %96 = vmatmul.f32.gmra.mxu0 %v75
    %v97 = vpop.f32.mrf.mxu0
    %v98 = vadd.f32 0.0, %v97
    %99 = vdwg.mxu0
    %v100 = vld [vmem:[%s4] sm:$0xff]
    %v101 = vld [vmem:[%s4 + $0x8] sm:$0xff]
    %v102 = vld [vmem:[%s4 + $0x10] sm:$0xff]
    %v103 = vld [vmem:[%s4 + $0x18] sm:$0xff]
    %v105 = vsel %vm70, %v56, 0
    %v108 = vsel %vm70, %v57, 0
    %110 = vmatpush.msra.mxu0 0.0
    %111 = vmatpush.msra.mxu0 0.0
    %112 = vmatpush.msra.mxu0 0.0
    %113 = vmatpush.msra.mxu0 0.0
    %114 = vmatpush.msra.mxu0 0.0
    %115 = vmatpush.msra.mxu0 0.0
    %116 = vmatpush.msra.mxu0 0.0
    %117 = vmatpush.msra.mxu0 0.0
    %118 = vmatpush.msra.mxu0 0.0
    %119 = vmatpush.msra.mxu0 0.0
    %120 = vmatpush.msra.mxu0 0.0
    %121 = vmatpush.msra.mxu0 0.0
    %122 = vmatpush.msra.mxu0 %v103
    %123 = vmatpush.msra.mxu0 %v102
    %124 = vmatpush.msra.mxu0 %v101
    %125 = vmatpush.msra.mxu0 %v100
    %126 = vmatmul.f32.gmra.mxu0 %v105
    %v127 = vpop.f32.mrf.mxu0
    %v128 = vadd.f32 0.0, %v127
    %129 = vmatmul.f32.gmra.mxu0 %v108
    %v130 = vpop.f32.mrf.mxu0
    %v131 = vadd.f32 0.0, %v130
    %132 = vdwg.mxu0
    %v133 = vld [vmem:[%s3] sm:$0xff]
    %v134 = vld [vmem:[%s3 + $0x8] sm:$0xff]
    %v135 = vld [vmem:[%s3 + $0x10] sm:$0xff]
    %v136 = vld [vmem:[%s3 + $0x18] sm:$0xff]
    %v138 = vsel %vm70, %v54, 0
    %v141 = vsel %vm70, %v55, 0
    %143 = vmatpush.msra.mxu0 0.0
    %144 = vmatpush.msra.mxu0 0.0
    %145 = vmatpush.msra.mxu0 0.0
    %146 = vmatpush.msra.mxu0 0.0
    %147 = vmatpush.msra.mxu0 0.0
    %148 = vmatpush.msra.mxu0 0.0
    %149 = vmatpush.msra.mxu0 0.0
    %150 = vmatpush.msra.mxu0 0.0
    %151 = vmatpush.msra.mxu0 0.0
    %152 = vmatpush.msra.mxu0 0.0
    %153 = vmatpush.msra.mxu0 0.0
    %154 = vmatpush.msra.mxu0 0.0
    %155 = vmatpush.msra.mxu0 %v136
    %156 = vmatpush.msra.mxu0 %v135
    %157 = vmatpush.msra.mxu0 %v134
    %158 = vmatpush.msra.mxu0 %v133
    %159 = vmatmul.f32.gmra.mxu0 %v138
    %v160 = vpop.f32.mrf.mxu0
    %v161 = vadd.f32 0.0, %v160
    %162 = vmatmul.f32.gmra.mxu0 %v141
    %v163 = vpop.f32.mrf.mxu0
    %v164 = vadd.f32 0.0, %v163
    %165 = vdwg.mxu0
    %vm166 = vcmask 64512
    %v168 = vsel %vm166, %v95, 0
    %v171 = vsel %vm166, %v128, 0
    %173 = vmatpush.xpose.msra.mxu0 0.0
    %174 = vmatpush.xpose.msra.mxu0 0.0
    %175 = vmatpush.xpose.msra.mxu0 0.0
    %176 = vmatpush.xpose.msra.mxu0 0.0
    %177 = vmatpush.xpose.msra.mxu0 0.0
    %178 = vmatpush.xpose.msra.mxu0 0.0
    %179 = vmatpush.xpose.msra.mxu0 0.0
    %180 = vmatpush.xpose.msra.mxu0 0.0
    %181 = vmatpush.xpose.msra.mxu0 0.0
    %182 = vmatpush.xpose.msra.mxu0 0.0
    %183 = vmatpush.xpose.msra.mxu0 0.0
    %184 = vmatpush.xpose.msra.mxu0 0.0
    %185 = vmatpush.xpose.msra.mxu0 0.0
    %186 = vmatpush.xpose.msra.mxu0 0.0
    %187 = vmatpush.xpose.msra.mxu0 0.0
    %188 = vmatpush.xpose.msra.mxu0 %v171
    %189 = vmatmul.f32.gmra.mxu0 %v168
    %v190 = vpop.f32.mrf.mxu0
    %v191 = vadd.f32 0.0, %v190
    %192 = vdwg.mxu0
    %v194 = vsel %vm166, %v98, 0
    %v197 = vsel %vm166, %v131, 0
    %199 = vmatpush.xpose.msra.mxu0 0.0
    %200 = vmatpush.xpose.msra.mxu0 0.0
    %201 = vmatpush.xpose.msra.mxu0 0.0
    %202 = vmatpush.xpose.msra.mxu0 0.0
    %203 = vmatpush.xpose.msra.mxu0 0.0
    %204 = vmatpush.xpose.msra.mxu0 0.0
    %205 = vmatpush.xpose.msra.mxu0 0.0
    %206 = vmatpush.xpose.msra.mxu0 0.0
    %207 = vmatpush.xpose.msra.mxu0 0.0
    %208 = vmatpush.xpose.msra.mxu0 0.0
    %209 = vmatpush.xpose.msra.mxu0 0.0
    %210 = vmatpush.xpose.msra.mxu0 0.0
    %211 = vmatpush.xpose.msra.mxu0 0.0
    %212 = vmatpush.xpose.msra.mxu0 0.0
    %213 = vmatpush.xpose.msra.mxu0 0.0
    %214 = vmatpush.xpose.msra.mxu0 %v197
    %215 = vmatmul.f32.gmra.mxu0 %v194
    %v216 = vpop.f32.mrf.mxu0
    %v217 = vadd.f32 0.0, %v216
    %218 = vdwg.mxu0
    %v219 = vsel %vm166, %v191, -inf
    %220 = vmax.xlane.f32.xlu0 %v219
    %v221 = vpop.xlane.xlu0 %220
    %v222 = vsel %vm166, %v217, -inf
    %223 = vmax.xlane.f32.xlu0 %v222
    %v224 = vpop.xlane.xlu0 %223
    %v225 = vsub.f32 %v191, %v221
    %v226 = vsub.f32 %v217, %v224
    %v227 = vmul.f32 %v225, 1.442695
    %v228 = vpow.pop %v227
    %v229 = vmul.f32 %v226, 1.442695
    %v230 = vpow.pop %v229
    %v231 = vsel %vm166, %v228, 0.0
    %232 = vadd.xlane.f32.xlu0 %v231
    %v233 = vpop.xlane.xlu0 %232
    %v234 = vsel %vm166, %v230, 0.0
    %235 = vadd.xlane.f32.xlu0 %v234
    %v236 = vpop.xlane.xlu0 %235
    %v237 = vrcp.pop %v233
    %v238 = vrcp.pop %v236
    %v239 = vmul.f32 %v228, %v237
    %v240 = vmul.f32 %v230, %v238
    %v242 = vsel %vm166, %v239, 0
    %244 = vmatpush.msra.mxu0 0.0
    %245 = vmatpush.msra.mxu0 0.0
    %246 = vmatpush.msra.mxu0 0.0
    %247 = vmatpush.msra.mxu0 0.0
    %248 = vmatpush.msra.mxu0 0.0
    %249 = vmatpush.msra.mxu0 0.0
    %250 = vmatpush.msra.mxu0 0.0
    %251 = vmatpush.msra.mxu0 0.0
    %252 = vmatpush.msra.mxu0 0.0
    %253 = vmatpush.msra.mxu0 0.0
    %254 = vmatpush.msra.mxu0 0.0
    %255 = vmatpush.msra.mxu0 0.0
    %256 = vmatpush.msra.mxu0 0.0
    %257 = vmatpush.msra.mxu0 0.0
    %258 = vmatpush.msra.mxu0 0.0
    %259 = vmatpush.msra.mxu0 %v161
    %260 = vmatmul.f32.gmra.mxu0 %v242
    %v261 = vpop.f32.mrf.mxu0
    %v262 = vadd.f32 0.0, %v261
    %263 = vdwg.mxu0
    %v265 = vsel %vm166, %v240, 0
    %267 = vmatpush.msra.mxu0 0.0
    %268 = vmatpush.msra.mxu0 0.0
    %269 = vmatpush.msra.mxu0 0.0
    %270 = vmatpush.msra.mxu0 0.0
    %271 = vmatpush.msra.mxu0 0.0
    %272 = vmatpush.msra.mxu0 0.0
    %273 = vmatpush.msra.mxu0 0.0
    %274 = vmatpush.msra.mxu0 0.0
    %275 = vmatpush.msra.mxu0 0.0
    %276 = vmatpush.msra.mxu0 0.0
    %277 = vmatpush.msra.mxu0 0.0
    %278 = vmatpush.msra.mxu0 0.0
    %279 = vmatpush.msra.mxu0 0.0
    %280 = vmatpush.msra.mxu0 0.0
    %281 = vmatpush.msra.mxu0 0.0
    %282 = vmatpush.msra.mxu0 %v164
    %283 = vmatmul.f32.gmra.mxu0 %v265
    %v284 = vpop.f32.mrf.mxu0
    %v285 = vadd.f32 0.0, %v284
    %286 = vdwg.mxu0
    %v287 = vld [vmem:[%s6] sm:$0xff]
    %v289 = vsel %vm166, %v262, 0
    %v292 = vsel %vm166, %v285, 0
    %294 = vmatpush.msra.mxu0 0.0
    %295 = vmatpush.msra.mxu0 0.0
    %296 = vmatpush.msra.mxu0 0.0
    %297 = vmatpush.msra.mxu0 0.0
    %298 = vmatpush.msra.mxu0 0.0
    %299 = vmatpush.msra.mxu0 0.0
    %300 = vmatpush.msra.mxu0 0.0
    %301 = vmatpush.msra.mxu0 0.0
    %302 = vmatpush.msra.mxu0 0.0
    %303 = vmatpush.msra.mxu0 0.0
    %304 = vmatpush.msra.mxu0 0.0
    %305 = vmatpush.msra.mxu0 0.0
    %306 = vmatpush.msra.mxu0 0.0
    %307 = vmatpush.msra.mxu0 0.0
    %308 = vmatpush.msra.mxu0 0.0
    %309 = vmatpush.msra.mxu0 %v287
    %310 = vmatmul.f32.gmra.mxu0 %v289
    %v311 = vpop.f32.mrf.mxu0
    %v312 = vadd.f32 0.0, %v311
    %313 = vmatmul.f32.gmra.mxu0 %v292
    %v314 = vpop.f32.mrf.mxu0
    %v315 = vadd.f32 0.0, %v314
    %316 = vdwg.mxu0
    %v317 = vadd.f32 %v64, %v312
    %v318 = vadd.f32 %v65, %v315
    %s319 = scalar_lea.vmem %s5, 32
    %v320 = vld [vmem:[%s319] sm:$0xff]
    %v321 = vld [vmem:[%s319 + $0x8] sm:$0xff]
    %v322 = vld [vmem:[%s319 + $0x10] sm:$0xff]
    %v323 = vld [vmem:[%s319 + $0x18] sm:$0xff]
    %324 = vmatpush.msra.mxu0 0.0
    %325 = vmatpush.msra.mxu0 0.0
    %326 = vmatpush.msra.mxu0 0.0
    %327 = vmatpush.msra.mxu0 0.0
    %328 = vmatpush.msra.mxu0 0.0
    %329 = vmatpush.msra.mxu0 0.0
    %330 = vmatpush.msra.mxu0 0.0
    %331 = vmatpush.msra.mxu0 0.0
    %332 = vmatpush.msra.mxu0 0.0
    %333 = vmatpush.msra.mxu0 0.0
    %334 = vmatpush.msra.mxu0 0.0
    %335 = vmatpush.msra.mxu0 0.0
    %336 = vmatpush.msra.mxu0 %v323
    %337 = vmatpush.msra.mxu0 %v322
    %338 = vmatpush.msra.mxu0 %v321
    %339 = vmatpush.msra.mxu0 %v320
    %340 = vmatmul.f32.gmra.mxu0 %v72
    %v341 = vpop.f32.mrf.mxu0
    %v342 = vadd.f32 0.0, %v341
    %343 = vmatmul.f32.gmra.mxu0 %v75
    %v344 = vpop.f32.mrf.mxu0
    %v345 = vadd.f32 0.0, %v344
    %346 = vdwg.mxu0
    %s347 = scalar_lea.vmem %s4, 32
    %v348 = vld [vmem:[%s347] sm:$0xff]
    %v349 = vld [vmem:[%s347 + $0x8] sm:$0xff]
    %v350 = vld [vmem:[%s347 + $0x10] sm:$0xff]
    %v351 = vld [vmem:[%s347 + $0x18] sm:$0xff]
    %352 = vmatpush.msra.mxu0 0.0
    %353 = vmatpush.msra.mxu0 0.0
    %354 = vmatpush.msra.mxu0 0.0
    %355 = vmatpush.msra.mxu0 0.0
    %356 = vmatpush.msra.mxu0 0.0
    %357 = vmatpush.msra.mxu0 0.0
    %358 = vmatpush.msra.mxu0 0.0
    %359 = vmatpush.msra.mxu0 0.0
    %360 = vmatpush.msra.mxu0 0.0
    %361 = vmatpush.msra.mxu0 0.0
    %362 = vmatpush.msra.mxu0 0.0
    %363 = vmatpush.msra.mxu0 0.0
    %364 = vmatpush.msra.mxu0 %v351
    %365 = vmatpush.msra.mxu0 %v350
    %366 = vmatpush.msra.mxu0 %v349
    %367 = vmatpush.msra.mxu0 %v348
    %368 = vmatmul.f32.gmra.mxu0 %v105
    %v369 = vpop.f32.mrf.mxu0
    %v370 = vadd.f32 0.0, %v369
    %371 = vmatmul.f32.gmra.mxu0 %v108
    %v372 = vpop.f32.mrf.mxu0
    %v373 = vadd.f32 0.0, %v372
    %374 = vdwg.mxu0
    %s375 = scalar_lea.vmem %s3, 32
    %v376 = vld [vmem:[%s375] sm:$0xff]
    %v377 = vld [vmem:[%s375 + $0x8] sm:$0xff]
    %v378 = vld [vmem:[%s375 + $0x10] sm:$0xff]
    %v379 = vld [vmem:[%s375 + $0x18] sm:$0xff]
    %380 = vmatpush.msra.mxu0 0.0
    %381 = vmatpush.msra.mxu0 0.0
    %382 = vmatpush.msra.mxu0 0.0
    %383 = vmatpush.msra.mxu0 0.0
    %384 = vmatpush.msra.mxu0 0.0
    %385 = vmatpush.msra.mxu0 0.0
    %386 = vmatpush.msra.mxu0 0.0
    %387 = vmatpush.msra.mxu0 0.0
    %388 = vmatpush.msra.mxu0 0.0
    %389 = vmatpush.msra.mxu0 0.0
    %390 = vmatpush.msra.mxu0 0.0
    %391 = vmatpush.msra.mxu0 0.0
    %392 = vmatpush.msra.mxu0 %v379
    %393 = vmatpush.msra.mxu0 %v378
    %394 = vmatpush.msra.mxu0 %v377
    %395 = vmatpush.msra.mxu0 %v376
    %396 = vmatmul.f32.gmra.mxu0 %v138
    %v397 = vpop.f32.mrf.mxu0
    %v398 = vadd.f32 0.0, %v397
    %399 = vmatmul.f32.gmra.mxu0 %v141
    %v400 = vpop.f32.mrf.mxu0
    %v401 = vadd.f32 0.0, %v400
    %402 = vdwg.mxu0
    %v404 = vsel %vm166, %v342, 0
    %v407 = vsel %vm166, %v370, 0
    %409 = vmatpush.xpose.msra.mxu0 0.0
    %410 = vmatpush.xpose.msra.mxu0 0.0
    %411 = vmatpush.xpose.msra.mxu0 0.0
    %412 = vmatpush.xpose.msra.mxu0 0.0
    %413 = vmatpush.xpose.msra.mxu0 0.0
    %414 = vmatpush.xpose.msra.mxu0 0.0
    %415 = vmatpush.xpose.msra.mxu0 0.0
    %416 = vmatpush.xpose.msra.mxu0 0.0
    %417 = vmatpush.xpose.msra.mxu0 0.0
    %418 = vmatpush.xpose.msra.mxu0 0.0
    %419 = vmatpush.xpose.msra.mxu0 0.0
    %420 = vmatpush.xpose.msra.mxu0 0.0
    %421 = vmatpush.xpose.msra.mxu0 0.0
    %422 = vmatpush.xpose.msra.mxu0 0.0
    %423 = vmatpush.xpose.msra.mxu0 0.0
    %424 = vmatpush.xpose.msra.mxu0 %v407
    %425 = vmatmul.f32.gmra.mxu0 %v404
    %v426 = vpop.f32.mrf.mxu0
    %v427 = vadd.f32 0.0, %v426
    %428 = vdwg.mxu0
    %v430 = vsel %vm166, %v345, 0
    %v433 = vsel %vm166, %v373, 0
    %435 = vmatpush.xpose.msra.mxu0 0.0
    %436 = vmatpush.xpose.msra.mxu0 0.0
    %437 = vmatpush.xpose.msra.mxu0 0.0
    %438 = vmatpush.xpose.msra.mxu0 0.0
    %439 = vmatpush.xpose.msra.mxu0 0.0
    %440 = vmatpush.xpose.msra.mxu0 0.0
    %441 = vmatpush.xpose.msra.mxu0 0.0
    %442 = vmatpush.xpose.msra.mxu0 0.0
    %443 = vmatpush.xpose.msra.mxu0 0.0
    %444 = vmatpush.xpose.msra.mxu0 0.0
    %445 = vmatpush.xpose.msra.mxu0 0.0
    %446 = vmatpush.xpose.msra.mxu0 0.0
    %447 = vmatpush.xpose.msra.mxu0 0.0
    %448 = vmatpush.xpose.msra.mxu0 0.0
    %449 = vmatpush.xpose.msra.mxu0 0.0
    %450 = vmatpush.xpose.msra.mxu0 %v433
    %451 = vmatmul.f32.gmra.mxu0 %v430
    %v452 = vpop.f32.mrf.mxu0
    %v453 = vadd.f32 0.0, %v452
    %454 = vdwg.mxu0
    %v455 = vsel %vm166, %v427, -inf
    %456 = vmax.xlane.f32.xlu0 %v455
    %v457 = vpop.xlane.xlu0 %456
    %v458 = vsel %vm166, %v453, -inf
    %459 = vmax.xlane.f32.xlu0 %v458
    %v460 = vpop.xlane.xlu0 %459
    %v461 = vsub.f32 %v427, %v457
    %v462 = vsub.f32 %v453, %v460
    %v463 = vmul.f32 %v461, 1.442695
    %v464 = vpow.pop %v463
    %v465 = vmul.f32 %v462, 1.442695
    %v466 = vpow.pop %v465
    %v467 = vsel %vm166, %v464, 0.0
    %468 = vadd.xlane.f32.xlu0 %v467
    %v469 = vpop.xlane.xlu0 %468
    %v470 = vsel %vm166, %v466, 0.0
    %471 = vadd.xlane.f32.xlu0 %v470
    %v472 = vpop.xlane.xlu0 %471
    %v473 = vrcp.pop %v469
    %v474 = vrcp.pop %v472
    %v475 = vmul.f32 %v464, %v473
    %v476 = vmul.f32 %v466, %v474
    %v478 = vsel %vm166, %v475, 0
    %480 = vmatpush.msra.mxu0 0.0
    %481 = vmatpush.msra.mxu0 0.0
    %482 = vmatpush.msra.mxu0 0.0
    %483 = vmatpush.msra.mxu0 0.0
    %484 = vmatpush.msra.mxu0 0.0
    %485 = vmatpush.msra.mxu0 0.0
    %486 = vmatpush.msra.mxu0 0.0
    %487 = vmatpush.msra.mxu0 0.0
    %488 = vmatpush.msra.mxu0 0.0
    %489 = vmatpush.msra.mxu0 0.0
    %490 = vmatpush.msra.mxu0 0.0
    %491 = vmatpush.msra.mxu0 0.0
    %492 = vmatpush.msra.mxu0 0.0
    %493 = vmatpush.msra.mxu0 0.0
    %494 = vmatpush.msra.mxu0 0.0
    %495 = vmatpush.msra.mxu0 %v398
    %496 = vmatmul.f32.gmra.mxu0 %v478
    %v497 = vpop.f32.mrf.mxu0
    %v498 = vadd.f32 0.0, %v497
    %499 = vdwg.mxu0
    %v501 = vsel %vm166, %v476, 0
    %503 = vmatpush.msra.mxu0 0.0
    %504 = vmatpush.msra.mxu0 0.0
    %505 = vmatpush.msra.mxu0 0.0
    %506 = vmatpush.msra.mxu0 0.0
    %507 = vmatpush.msra.mxu0 0.0
    %508 = vmatpush.msra.mxu0 0.0
    %509 = vmatpush.msra.mxu0 0.0
    %510 = vmatpush.msra.mxu0 0.0
    %511 = vmatpush.msra.mxu0 0.0
    %512 = vmatpush.msra.mxu0 0.0
    %513 = vmatpush.msra.mxu0 0.0
    %514 = vmatpush.msra.mxu0 0.0
    %515 = vmatpush.msra.mxu0 0.0
    %516 = vmatpush.msra.mxu0 0.0
    %517 = vmatpush.msra.mxu0 0.0
    %518 = vmatpush.msra.mxu0 %v401
    %519 = vmatmul.f32.gmra.mxu0 %v501
    %v520 = vpop.f32.mrf.mxu0
    %v521 = vadd.f32 0.0, %v520
    %522 = vdwg.mxu0
    %s523 = scalar_lea.vmem %s6, 8
    %v524 = vld [vmem:[%s523] sm:$0xff]
    %v526 = vsel %vm166, %v498, 0
    %v529 = vsel %vm166, %v521, 0
    %531 = vmatpush.msra.mxu0 0.0
    %532 = vmatpush.msra.mxu0 0.0
    %533 = vmatpush.msra.mxu0 0.0
    %534 = vmatpush.msra.mxu0 0.0
    %535 = vmatpush.msra.mxu0 0.0
    %536 = vmatpush.msra.mxu0 0.0
    %537 = vmatpush.msra.mxu0 0.0
    %538 = vmatpush.msra.mxu0 0.0
    %539 = vmatpush.msra.mxu0 0.0
    %540 = vmatpush.msra.mxu0 0.0
    %541 = vmatpush.msra.mxu0 0.0
    %542 = vmatpush.msra.mxu0 0.0
    %543 = vmatpush.msra.mxu0 0.0
    %544 = vmatpush.msra.mxu0 0.0
    %545 = vmatpush.msra.mxu0 0.0
    %546 = vmatpush.msra.mxu0 %v524
    %547 = vmatmul.f32.gmra.mxu0 %v526
    %v548 = vpop.f32.mrf.mxu0
    %v549 = vadd.f32 0.0, %v548
    %550 = vmatmul.f32.gmra.mxu0 %v529
    %v551 = vpop.f32.mrf.mxu0
    %v552 = vadd.f32 0.0, %v551
    %553 = vdwg.mxu0
    %v554 = vadd.f32 %v317, %v549
    %v555 = vadd.f32 %v318, %v552
    %s556 = scalar_lea.vmem %s5, 64
    %v557 = vld [vmem:[%s556] sm:$0xff]
    %v558 = vld [vmem:[%s556 + $0x8] sm:$0xff]
    %v559 = vld [vmem:[%s556 + $0x10] sm:$0xff]
    %v560 = vld [vmem:[%s556 + $0x18] sm:$0xff]
    %561 = vmatpush.msra.mxu0 0.0
    %562 = vmatpush.msra.mxu0 0.0
    %563 = vmatpush.msra.mxu0 0.0
    %564 = vmatpush.msra.mxu0 0.0
    %565 = vmatpush.msra.mxu0 0.0
    %566 = vmatpush.msra.mxu0 0.0
    %567 = vmatpush.msra.mxu0 0.0
    %568 = vmatpush.msra.mxu0 0.0
    %569 = vmatpush.msra.mxu0 0.0
    %570 = vmatpush.msra.mxu0 0.0
    %571 = vmatpush.msra.mxu0 0.0
    %572 = vmatpush.msra.mxu0 0.0
    %573 = vmatpush.msra.mxu0 %v560
    %574 = vmatpush.msra.mxu0 %v559
    %575 = vmatpush.msra.mxu0 %v558
    %576 = vmatpush.msra.mxu0 %v557
    %577 = vmatmul.f32.gmra.mxu0 %v72
    %v578 = vpop.f32.mrf.mxu0
    %v579 = vadd.f32 0.0, %v578
    %580 = vmatmul.f32.gmra.mxu0 %v75
    %v581 = vpop.f32.mrf.mxu0
    %v582 = vadd.f32 0.0, %v581
    %583 = vdwg.mxu0
    %s584 = scalar_lea.vmem %s4, 64
    %v585 = vld [vmem:[%s584] sm:$0xff]
    %v586 = vld [vmem:[%s584 + $0x8] sm:$0xff]
    %v587 = vld [vmem:[%s584 + $0x10] sm:$0xff]
    %v588 = vld [vmem:[%s584 + $0x18] sm:$0xff]
    %589 = vmatpush.msra.mxu0 0.0
    %590 = vmatpush.msra.mxu0 0.0
    %591 = vmatpush.msra.mxu0 0.0
    %592 = vmatpush.msra.mxu0 0.0
    %593 = vmatpush.msra.mxu0 0.0
    %594 = vmatpush.msra.mxu0 0.0
    %595 = vmatpush.msra.mxu0 0.0
    %596 = vmatpush.msra.mxu0 0.0
    %597 = vmatpush.msra.mxu0 0.0
    %598 = vmatpush.msra.mxu0 0.0
    %599 = vmatpush.msra.mxu0 0.0
    %600 = vmatpush.msra.mxu0 0.0
    %601 = vmatpush.msra.mxu0 %v588
    %602 = vmatpush.msra.mxu0 %v587
    %603 = vmatpush.msra.mxu0 %v586
    %604 = vmatpush.msra.mxu0 %v585
    %605 = vmatmul.f32.gmra.mxu0 %v105
    %v606 = vpop.f32.mrf.mxu0
    %v607 = vadd.f32 0.0, %v606
    %608 = vmatmul.f32.gmra.mxu0 %v108
    %v609 = vpop.f32.mrf.mxu0
    %v610 = vadd.f32 0.0, %v609
    %611 = vdwg.mxu0
    %s612 = scalar_lea.vmem %s3, 64
    %v613 = vld [vmem:[%s612] sm:$0xff]
    %v614 = vld [vmem:[%s612 + $0x8] sm:$0xff]
    %v615 = vld [vmem:[%s612 + $0x10] sm:$0xff]
    %v616 = vld [vmem:[%s612 + $0x18] sm:$0xff]
    %617 = vmatpush.msra.mxu0 0.0
    %618 = vmatpush.msra.mxu0 0.0
    %619 = vmatpush.msra.mxu0 0.0
    %620 = vmatpush.msra.mxu0 0.0
    %621 = vmatpush.msra.mxu0 0.0
    %622 = vmatpush.msra.mxu0 0.0
    %623 = vmatpush.msra.mxu0 0.0
    %624 = vmatpush.msra.mxu0 0.0
    %625 = vmatpush.msra.mxu0 0.0
    %626 = vmatpush.msra.mxu0 0.0
    %627 = vmatpush.msra.mxu0 0.0
    %628 = vmatpush.msra.mxu0 0.0
    %629 = vmatpush.msra.mxu0 %v616
    %630 = vmatpush.msra.mxu0 %v615
    %631 = vmatpush.msra.mxu0 %v614
    %632 = vmatpush.msra.mxu0 %v613
    %633 = vmatmul.f32.gmra.mxu0 %v138
    %v634 = vpop.f32.mrf.mxu0
    %v635 = vadd.f32 0.0, %v634
    %636 = vmatmul.f32.gmra.mxu0 %v141
    %v637 = vpop.f32.mrf.mxu0
    %v638 = vadd.f32 0.0, %v637
    %639 = vdwg.mxu0
    %v641 = vsel %vm166, %v579, 0
    %v644 = vsel %vm166, %v607, 0
    %646 = vmatpush.xpose.msra.mxu0 0.0
    %647 = vmatpush.xpose.msra.mxu0 0.0
    %648 = vmatpush.xpose.msra.mxu0 0.0
    %649 = vmatpush.xpose.msra.mxu0 0.0
    %650 = vmatpush.xpose.msra.mxu0 0.0
    %651 = vmatpush.xpose.msra.mxu0 0.0
    %652 = vmatpush.xpose.msra.mxu0 0.0
    %653 = vmatpush.xpose.msra.mxu0 0.0
    %654 = vmatpush.xpose.msra.mxu0 0.0
    %655 = vmatpush.xpose.msra.mxu0 0.0
    %656 = vmatpush.xpose.msra.mxu0 0.0
    %657 = vmatpush.xpose.msra.mxu0 0.0
    %658 = vmatpush.xpose.msra.mxu0 0.0
    %659 = vmatpush.xpose.msra.mxu0 0.0
    %660 = vmatpush.xpose.msra.mxu0 0.0
    %661 = vmatpush.xpose.msra.mxu0 %v644
    %662 = vmatmul.f32.gmra.mxu0 %v641
    %v663 = vpop.f32.mrf.mxu0
    %v664 = vadd.f32 0.0, %v663
    %665 = vdwg.mxu0
    %v667 = vsel %vm166, %v582, 0
    %v670 = vsel %vm166, %v610, 0
    %672 = vmatpush.xpose.msra.mxu0 0.0
    %673 = vmatpush.xpose.msra.mxu0 0.0
    %674 = vmatpush.xpose.msra.mxu0 0.0
    %675 = vmatpush.xpose.msra.mxu0 0.0
    %676 = vmatpush.xpose.msra.mxu0 0.0
    %677 = vmatpush.xpose.msra.mxu0 0.0
    %678 = vmatpush.xpose.msra.mxu0 0.0
    %679 = vmatpush.xpose.msra.mxu0 0.0
    %680 = vmatpush.xpose.msra.mxu0 0.0
    %681 = vmatpush.xpose.msra.mxu0 0.0
    %682 = vmatpush.xpose.msra.mxu0 0.0
    %683 = vmatpush.xpose.msra.mxu0 0.0
    %684 = vmatpush.xpose.msra.mxu0 0.0
    %685 = vmatpush.xpose.msra.mxu0 0.0
    %686 = vmatpush.xpose.msra.mxu0 0.0
    %687 = vmatpush.xpose.msra.mxu0 %v670
    %688 = vmatmul.f32.gmra.mxu0 %v667
    %v689 = vpop.f32.mrf.mxu0
    %v690 = vadd.f32 0.0, %v689
    %691 = vdwg.mxu0
    %v692 = vsel %vm166, %v664, -inf
    %693 = vmax.xlane.f32.xlu0 %v692
    %v694 = vpop.xlane.xlu0 %693
    %v695 = vsel %vm166, %v690, -inf
    %696 = vmax.xlane.f32.xlu0 %v695
    %v697 = vpop.xlane.xlu0 %696
    %v698 = vsub.f32 %v664, %v694
    %v699 = vsub.f32 %v690, %v697
    %v700 = vmul.f32 %v698, 1.442695
    %v701 = vpow.pop %v700
    %v702 = vmul.f32 %v699, 1.442695
    %v703 = vpow.pop %v702
    %v704 = vsel %vm166, %v701, 0.0
    %705 = vadd.xlane.f32.xlu0 %v704
    %v706 = vpop.xlane.xlu0 %705
    %v707 = vsel %vm166, %v703, 0.0
    %708 = vadd.xlane.f32.xlu0 %v707
    %v709 = vpop.xlane.xlu0 %708
    %v710 = vrcp.pop %v706
    %v711 = vrcp.pop %v709
    %v712 = vmul.f32 %v701, %v710
    %v713 = vmul.f32 %v703, %v711
    %v715 = vsel %vm166, %v712, 0
    %717 = vmatpush.msra.mxu0 0.0
    %718 = vmatpush.msra.mxu0 0.0
    %719 = vmatpush.msra.mxu0 0.0
    %720 = vmatpush.msra.mxu0 0.0
    %721 = vmatpush.msra.mxu0 0.0
    %722 = vmatpush.msra.mxu0 0.0
    %723 = vmatpush.msra.mxu0 0.0
    %724 = vmatpush.msra.mxu0 0.0
    %725 = vmatpush.msra.mxu0 0.0
    %726 = vmatpush.msra.mxu0 0.0
    %727 = vmatpush.msra.mxu0 0.0
    %728 = vmatpush.msra.mxu0 0.0
    %729 = vmatpush.msra.mxu0 0.0
    %730 = vmatpush.msra.mxu0 0.0
    %731 = vmatpush.msra.mxu0 0.0
    %732 = vmatpush.msra.mxu0 %v635
    %733 = vmatmul.f32.gmra.mxu0 %v715
    %v734 = vpop.f32.mrf.mxu0
    %v735 = vadd.f32 0.0, %v734
    %736 = vdwg.mxu0
    %v738 = vsel %vm166, %v713, 0
    %740 = vmatpush.msra.mxu0 0.0
    %741 = vmatpush.msra.mxu0 0.0
    %742 = vmatpush.msra.mxu0 0.0
    %743 = vmatpush.msra.mxu0 0.0
    %744 = vmatpush.msra.mxu0 0.0
    %745 = vmatpush.msra.mxu0 0.0
    %746 = vmatpush.msra.mxu0 0.0
    %747 = vmatpush.msra.mxu0 0.0
    %748 = vmatpush.msra.mxu0 0.0
    %749 = vmatpush.msra.mxu0 0.0
    %750 = vmatpush.msra.mxu0 0.0
    %751 = vmatpush.msra.mxu0 0.0
    %752 = vmatpush.msra.mxu0 0.0
    %753 = vmatpush.msra.mxu0 0.0
    %754 = vmatpush.msra.mxu0 0.0
    %755 = vmatpush.msra.mxu0 %v638
    %756 = vmatmul.f32.gmra.mxu0 %v738
    %v757 = vpop.f32.mrf.mxu0
    %v758 = vadd.f32 0.0, %v757
    %759 = vdwg.mxu0
    %s760 = scalar_lea.vmem %s6, 16
    %v761 = vld [vmem:[%s760] sm:$0xff]
    %v763 = vsel %vm166, %v735, 0
    %v766 = vsel %vm166, %v758, 0
    %768 = vmatpush.msra.mxu0 0.0
    %769 = vmatpush.msra.mxu0 0.0
    %770 = vmatpush.msra.mxu0 0.0
    %771 = vmatpush.msra.mxu0 0.0
    %772 = vmatpush.msra.mxu0 0.0
    %773 = vmatpush.msra.mxu0 0.0
    %774 = vmatpush.msra.mxu0 0.0
    %775 = vmatpush.msra.mxu0 0.0
    %776 = vmatpush.msra.mxu0 0.0
    %777 = vmatpush.msra.mxu0 0.0
    %778 = vmatpush.msra.mxu0 0.0
    %779 = vmatpush.msra.mxu0 0.0
    %780 = vmatpush.msra.mxu0 0.0
    %781 = vmatpush.msra.mxu0 0.0
    %782 = vmatpush.msra.mxu0 0.0
    %783 = vmatpush.msra.mxu0 %v761
    %784 = vmatmul.f32.gmra.mxu0 %v763
    %v785 = vpop.f32.mrf.mxu0
    %v786 = vadd.f32 0.0, %v785
    %787 = vmatmul.f32.gmra.mxu0 %v766
    %v788 = vpop.f32.mrf.mxu0
    %v789 = vadd.f32 0.0, %v788
    %790 = vdwg.mxu0
    %v791 = vadd.f32 %v554, %v786
    %v792 = vadd.f32 %v555, %v789
    %s793 = scalar_lea.vmem %s5, 96
    %v794 = vld [vmem:[%s793] sm:$0xff]
    %v795 = vld [vmem:[%s793 + $0x8] sm:$0xff]
    %v796 = vld [vmem:[%s793 + $0x10] sm:$0xff]
    %v797 = vld [vmem:[%s793 + $0x18] sm:$0xff]
    %798 = vmatpush.msra.mxu0 0.0
    %799 = vmatpush.msra.mxu0 0.0
    %800 = vmatpush.msra.mxu0 0.0
    %801 = vmatpush.msra.mxu0 0.0
    %802 = vmatpush.msra.mxu0 0.0
    %803 = vmatpush.msra.mxu0 0.0
    %804 = vmatpush.msra.mxu0 0.0
    %805 = vmatpush.msra.mxu0 0.0
    %806 = vmatpush.msra.mxu0 0.0
    %807 = vmatpush.msra.mxu0 0.0
    %808 = vmatpush.msra.mxu0 0.0
    %809 = vmatpush.msra.mxu0 0.0
    %810 = vmatpush.msra.mxu0 %v797
    %811 = vmatpush.msra.mxu0 %v796
    %812 = vmatpush.msra.mxu0 %v795
    %813 = vmatpush.msra.mxu0 %v794
    %814 = vmatmul.f32.gmra.mxu0 %v72
    %v815 = vpop.f32.mrf.mxu0
    %v816 = vadd.f32 0.0, %v815
    %817 = vmatmul.f32.gmra.mxu0 %v75
    %v818 = vpop.f32.mrf.mxu0
    %v819 = vadd.f32 0.0, %v818
    %820 = vdwg.mxu0
    %s821 = scalar_lea.vmem %s4, 96
    %v822 = vld [vmem:[%s821] sm:$0xff]
    %v823 = vld [vmem:[%s821 + $0x8] sm:$0xff]
    %v824 = vld [vmem:[%s821 + $0x10] sm:$0xff]
    %v825 = vld [vmem:[%s821 + $0x18] sm:$0xff]
    %826 = vmatpush.msra.mxu0 0.0
    %827 = vmatpush.msra.mxu0 0.0
    %828 = vmatpush.msra.mxu0 0.0
    %829 = vmatpush.msra.mxu0 0.0
    %830 = vmatpush.msra.mxu0 0.0
    %831 = vmatpush.msra.mxu0 0.0
    %832 = vmatpush.msra.mxu0 0.0
    %833 = vmatpush.msra.mxu0 0.0
    %834 = vmatpush.msra.mxu0 0.0
    %835 = vmatpush.msra.mxu0 0.0
    %836 = vmatpush.msra.mxu0 0.0
    %837 = vmatpush.msra.mxu0 0.0
    %838 = vmatpush.msra.mxu0 %v825
    %839 = vmatpush.msra.mxu0 %v824
    %840 = vmatpush.msra.mxu0 %v823
    %841 = vmatpush.msra.mxu0 %v822
    %842 = vmatmul.f32.gmra.mxu0 %v105
    %v843 = vpop.f32.mrf.mxu0
    %v844 = vadd.f32 0.0, %v843
    %845 = vmatmul.f32.gmra.mxu0 %v108
    %v846 = vpop.f32.mrf.mxu0
    %v847 = vadd.f32 0.0, %v846
    %848 = vdwg.mxu0
    %s849 = scalar_lea.vmem %s3, 96
    %v850 = vld [vmem:[%s849] sm:$0xff]
    %v851 = vld [vmem:[%s849 + $0x8] sm:$0xff]
    %v852 = vld [vmem:[%s849 + $0x10] sm:$0xff]
    %v853 = vld [vmem:[%s849 + $0x18] sm:$0xff]
    %854 = vmatpush.msra.mxu0 0.0
    %855 = vmatpush.msra.mxu0 0.0
    %856 = vmatpush.msra.mxu0 0.0
    %857 = vmatpush.msra.mxu0 0.0
    %858 = vmatpush.msra.mxu0 0.0
    %859 = vmatpush.msra.mxu0 0.0
    %860 = vmatpush.msra.mxu0 0.0
    %861 = vmatpush.msra.mxu0 0.0
    %862 = vmatpush.msra.mxu0 0.0
    %863 = vmatpush.msra.mxu0 0.0
    %864 = vmatpush.msra.mxu0 0.0
    %865 = vmatpush.msra.mxu0 0.0
    %866 = vmatpush.msra.mxu0 %v853
    %867 = vmatpush.msra.mxu0 %v852
    %868 = vmatpush.msra.mxu0 %v851
    %869 = vmatpush.msra.mxu0 %v850
    %870 = vmatmul.f32.gmra.mxu0 %v138
    %v871 = vpop.f32.mrf.mxu0
    %v872 = vadd.f32 0.0, %v871
    %873 = vmatmul.f32.gmra.mxu0 %v141
    %v874 = vpop.f32.mrf.mxu0
    %v875 = vadd.f32 0.0, %v874
    %876 = vdwg.mxu0
    %v878 = vsel %vm166, %v816, 0
    %v881 = vsel %vm166, %v844, 0
    %883 = vmatpush.xpose.msra.mxu0 0.0
    %884 = vmatpush.xpose.msra.mxu0 0.0
    %885 = vmatpush.xpose.msra.mxu0 0.0
    %886 = vmatpush.xpose.msra.mxu0 0.0
    %887 = vmatpush.xpose.msra.mxu0 0.0
    %888 = vmatpush.xpose.msra.mxu0 0.0
    %889 = vmatpush.xpose.msra.mxu0 0.0
    %890 = vmatpush.xpose.msra.mxu0 0.0
    %891 = vmatpush.xpose.msra.mxu0 0.0
    %892 = vmatpush.xpose.msra.mxu0 0.0
    %893 = vmatpush.xpose.msra.mxu0 0.0
    %894 = vmatpush.xpose.msra.mxu0 0.0
    %895 = vmatpush.xpose.msra.mxu0 0.0
    %896 = vmatpush.xpose.msra.mxu0 0.0
    %897 = vmatpush.xpose.msra.mxu0 0.0
    %898 = vmatpush.xpose.msra.mxu0 %v881
    %899 = vmatmul.f32.gmra.mxu0 %v878
    %v900 = vpop.f32.mrf.mxu0
    %v901 = vadd.f32 0.0, %v900
    %902 = vdwg.mxu0
    %v904 = vsel %vm166, %v819, 0
    %v907 = vsel %vm166, %v847, 0
    %909 = vmatpush.xpose.msra.mxu0 0.0
    %910 = vmatpush.xpose.msra.mxu0 0.0
    %911 = vmatpush.xpose.msra.mxu0 0.0
    %912 = vmatpush.xpose.msra.mxu0 0.0
    %913 = vmatpush.xpose.msra.mxu0 0.0
    %914 = vmatpush.xpose.msra.mxu0 0.0
    %915 = vmatpush.xpose.msra.mxu0 0.0
    %916 = vmatpush.xpose.msra.mxu0 0.0
    %917 = vmatpush.xpose.msra.mxu0 0.0
    %918 = vmatpush.xpose.msra.mxu0 0.0
    %919 = vmatpush.xpose.msra.mxu0 0.0
    %920 = vmatpush.xpose.msra.mxu0 0.0
    %921 = vmatpush.xpose.msra.mxu0 0.0
    %922 = vmatpush.xpose.msra.mxu0 0.0
    %923 = vmatpush.xpose.msra.mxu0 0.0
    %924 = vmatpush.xpose.msra.mxu0 %v907
    %925 = vmatmul.f32.gmra.mxu0 %v904
    %v926 = vpop.f32.mrf.mxu0
    %v927 = vadd.f32 0.0, %v926
    %928 = vdwg.mxu0
    %v929 = vsel %vm166, %v901, -inf
    %930 = vmax.xlane.f32.xlu0 %v929
    %v931 = vpop.xlane.xlu0 %930
    %v932 = vsel %vm166, %v927, -inf
    %933 = vmax.xlane.f32.xlu0 %v932
    %v934 = vpop.xlane.xlu0 %933
    %v935 = vsub.f32 %v901, %v931
    %v936 = vsub.f32 %v927, %v934
    %v937 = vmul.f32 %v935, 1.442695
    %v938 = vpow.pop %v937
    %v939 = vmul.f32 %v936, 1.442695
    %v940 = vpow.pop %v939
    %v941 = vsel %vm166, %v938, 0.0
    %942 = vadd.xlane.f32.xlu0 %v941
    %v943 = vpop.xlane.xlu0 %942
    %v944 = vsel %vm166, %v940, 0.0
    %945 = vadd.xlane.f32.xlu0 %v944
    %v946 = vpop.xlane.xlu0 %945
    %v947 = vrcp.pop %v943
    %v948 = vrcp.pop %v946
    %v949 = vmul.f32 %v938, %v947
    %v950 = vmul.f32 %v940, %v948
    %v952 = vsel %vm166, %v949, 0
    %954 = vmatpush.msra.mxu0 0.0
    %955 = vmatpush.msra.mxu0 0.0
    %956 = vmatpush.msra.mxu0 0.0
    %957 = vmatpush.msra.mxu0 0.0
    %958 = vmatpush.msra.mxu0 0.0
    %959 = vmatpush.msra.mxu0 0.0
    %960 = vmatpush.msra.mxu0 0.0
    %961 = vmatpush.msra.mxu0 0.0
    %962 = vmatpush.msra.mxu0 0.0
    %963 = vmatpush.msra.mxu0 0.0
    %964 = vmatpush.msra.mxu0 0.0
    %965 = vmatpush.msra.mxu0 0.0
    %966 = vmatpush.msra.mxu0 0.0
    %967 = vmatpush.msra.mxu0 0.0
    %968 = vmatpush.msra.mxu0 0.0
    %969 = vmatpush.msra.mxu0 %v872
    %970 = vmatmul.f32.gmra.mxu0 %v952
    %v971 = vpop.f32.mrf.mxu0
    %v972 = vadd.f32 0.0, %v971
    %973 = vdwg.mxu0
    %v975 = vsel %vm166, %v950, 0
    %977 = vmatpush.msra.mxu0 0.0
    %978 = vmatpush.msra.mxu0 0.0
    %979 = vmatpush.msra.mxu0 0.0
    %980 = vmatpush.msra.mxu0 0.0
    %981 = vmatpush.msra.mxu0 0.0
    %982 = vmatpush.msra.mxu0 0.0
    %983 = vmatpush.msra.mxu0 0.0
    %984 = vmatpush.msra.mxu0 0.0
    %985 = vmatpush.msra.mxu0 0.0
    %986 = vmatpush.msra.mxu0 0.0
    %987 = vmatpush.msra.mxu0 0.0
    %988 = vmatpush.msra.mxu0 0.0
    %989 = vmatpush.msra.mxu0 0.0
    %990 = vmatpush.msra.mxu0 0.0
    %991 = vmatpush.msra.mxu0 0.0
    %992 = vmatpush.msra.mxu0 %v875
    %993 = vmatmul.f32.gmra.mxu0 %v975
    %v994 = vpop.f32.mrf.mxu0
    %v995 = vadd.f32 0.0, %v994
    %996 = vdwg.mxu0
    %s997 = scalar_lea.vmem %s6, 24
    %v998 = vld [vmem:[%s997] sm:$0xff]
    %v1000 = vsel %vm166, %v972, 0
    %v1003 = vsel %vm166, %v995, 0
    %1005 = vmatpush.msra.mxu0 0.0
    %1006 = vmatpush.msra.mxu0 0.0
    %1007 = vmatpush.msra.mxu0 0.0
    %1008 = vmatpush.msra.mxu0 0.0
    %1009 = vmatpush.msra.mxu0 0.0
    %1010 = vmatpush.msra.mxu0 0.0
    %1011 = vmatpush.msra.mxu0 0.0
    %1012 = vmatpush.msra.mxu0 0.0
    %1013 = vmatpush.msra.mxu0 0.0
    %1014 = vmatpush.msra.mxu0 0.0
    %1015 = vmatpush.msra.mxu0 0.0
    %1016 = vmatpush.msra.mxu0 0.0
    %1017 = vmatpush.msra.mxu0 0.0
    %1018 = vmatpush.msra.mxu0 0.0
    %1019 = vmatpush.msra.mxu0 0.0
    %1020 = vmatpush.msra.mxu0 %v998
    %1021 = vmatmul.f32.gmra.mxu0 %v1000
    %v1022 = vpop.f32.mrf.mxu0
    %v1023 = vadd.f32 0.0, %v1022
    %1024 = vmatmul.f32.gmra.mxu0 %v1003
    %v1025 = vpop.f32.mrf.mxu0
    %v1026 = vadd.f32 0.0, %v1025
    %1027 = vdwg.mxu0
    %v1028 = vadd.f32 %v791, %v1023
    %v1029 = vadd.f32 %v792, %v1026
    %v1030 = vld [vmem:[%s8] sm:$0x1]
    %v1031 = vld [vmem:[%s9] sm:$0x1]
    %v1032 = vsel %vm70, %v1028, 0.0
    %1033 = vadd.xlane.f32.xlu0 %v1032
    %v1034 = vpop.xlane.xlu0 %1033
    %v1035 = vsel %vm70, %v1029, 0.0
    %1036 = vadd.xlane.f32.xlu0 %v1035
    %v1037 = vpop.xlane.xlu0 %1036
    %v1038 = vrcp.pop 32.0
    %v1039 = vmul.f32 32.0, %v1038
    %v1040 = vsub.f32 1.0, %v1039
    %v1041 = vmul.f32 %v1038, %v1040
    %v1042 = vadd.f32 %v1038, %v1041
    %vm1043 = vweird.f32 %v1038
    %v1044 = vsel %vm1043, %v1038, %v1042
    %v1045 = vmul.f32 %v1034, %v1044
    %v1046 = vmul.f32 %v1037, %v1044
    %v1047 = vsub.f32 %v1028, %v1045
    %v1048 = vsub.f32 %v1029, %v1046
    %v1049 = vmul.f32 %v1047, %v1047
    %v1050 = vmul.f32 %v1048, %v1048
    %v1051 = vsel %vm70, %v1049, 0.0
    %1052 = vadd.xlane.f32.xlu0 %v1051
    %v1053 = vpop.xlane.xlu0 %1052
    %v1054 = vsel %vm70, %v1050, 0.0
    %1055 = vadd.xlane.f32.xlu0 %v1054
    %v1056 = vpop.xlane.xlu0 %1055
    %v1057 = vmul.f32 %v1053, %v1044
    %v1058 = vmul.f32 %v1056, %v1044
    %v1059 = vadd.f32 %v1057, 1e-05
    %v1060 = vadd.f32 %v1058, 1e-05
    %v1061 = vrsqrt.pop %v1059
    %v1062 = vmul.f32 %v1061, %v1059
    %v1063 = vmul.f32 %v1062, %v1061
    %v1064 = vmul.f32 0.5, %v1063
    %v1065 = vsub.f32 1.5, %v1064
    %v1066 = vmul.f32 %v1061, %v1065
    %vm1067 = vweird.f32 %v1059
    %vm1068 = vweird.f32 %v1061
    %vm1069 = vmor %vm1067, %vm1068
    %v1070 = vsel %vm1069, %v1061, %v1066
    %v1071 = vrsqrt.pop %v1060
    %v1072 = vmul.f32 %v1071, %v1060
    %v1073 = vmul.f32 %v1072, %v1071
    %v1074 = vmul.f32 0.5, %v1073
    %v1075 = vsub.f32 1.5, %v1074
    %v1076 = vmul.f32 %v1071, %v1075
    %vm1077 = vweird.f32 %v1060
    %vm1078 = vweird.f32 %v1071
    %vm1079 = vmor %vm1077, %vm1078
    %v1080 = vsel %vm1079, %v1071, %v1076
    %v1081 = vmul.f32 %v1047, %v1070
    %v1082 = vmul.f32 %v1048, %v1080
    %v1084 = vperm.slane %v1030, 0
    %v1086 = vmul.f32 %v1081, %v1084
    %v1087 = vmul.f32 %v1082, %v1084
    %v1089 = vperm.slane %v1031, 0
    %v1091 = vadd.f32 %v1086, %v1089
    %v1092 = vadd.f32 %v1087, %v1089
    %v1093 = vld [vmem:[%s12] sm:$0xff]
    %v1094 = vld [vmem:[%s12 + $0x8] sm:$0xff]
    %v1095 = vld [vmem:[%s12 + $0x10] sm:$0xff]
    %v1096 = vld [vmem:[%s12 + $0x18] sm:$0xff]
    %v1097 = vld [vmem:[%s13] sm:$0x1]
    %v1099 = vperm.slane %v1097, 0
    %v1102 = vsel %vm70, %v1091, 0
    %v1105 = vsel %vm70, %v1092, 0
    %1107 = vmatpush.msra.mxu0 0.0
    %1108 = vmatpush.msra.mxu0 0.0
    %1109 = vmatpush.msra.mxu0 0.0
    %1110 = vmatpush.msra.mxu0 0.0
    %1111 = vmatpush.msra.mxu0 0.0
    %1112 = vmatpush.msra.mxu0 0.0
    %1113 = vmatpush.msra.mxu0 0.0
    %1114 = vmatpush.msra.mxu0 0.0
    %1115 = vmatpush.msra.mxu0 0.0
    %1116 = vmatpush.msra.mxu0 0.0
    %1117 = vmatpush.msra.mxu0 0.0
    %1118 = vmatpush.msra.mxu0 0.0
    %1119 = vmatpush.msra.mxu0 %v1096
    %1120 = vmatpush.msra.mxu0 %v1095
    %1121 = vmatpush.msra.mxu0 %v1094
    %1122 = vmatpush.msra.mxu0 %v1093
    %1123 = vmatmul.f32.gmra.mxu0 %v1102
    %v1124 = vpop.f32.mrf.mxu0
    %v1125 = vadd.f32 %v1099, %v1124
    %1126 = vmatmul.f32.gmra.mxu0 %v1105
    %v1127 = vpop.f32.mrf.mxu0
    %v1128 = vadd.f32 %v1099, %v1127
    %1129 = vdwg.mxu0
    %v1130 = vmax.f32 %v1125, 0.0
    %v1131 = vmax.f32 %v1128, 0.0
    %v1132 = vld [vmem:[%s14] sm:$0xff]
    %v1133 = vld [vmem:[%s14 + $0x8] sm:$0xff]
    %v1134 = vld [vmem:[%s14 + $0x10] sm:$0xff]
    %v1135 = vld [vmem:[%s14 + $0x18] sm:$0xff]
    %v1136 = vld [vmem:[%s14 + $0x20] sm:$0xff]
    %v1137 = vld [vmem:[%s14 + $0x28] sm:$0xff]
    %v1138 = vld [vmem:[%s14 + $0x30] sm:$0xff]
    %v1139 = vld [vmem:[%s14 + $0x38] sm:$0xff]
    %v1140 = vld [vmem:[%s15] sm:$0x1]
    %v1142 = vperm.slane %v1140, 0
    %vm1144 = vcmask 523264
    %v1146 = vsel %vm1144, %v1130, 0
    %v1149 = vsel %vm1144, %v1131, 0
    %1151 = vmatpush.msra.mxu0 0.0
    %1152 = vmatpush.msra.mxu0 0.0
    %1153 = vmatpush.msra.mxu0 0.0
    %1154 = vmatpush.msra.mxu0 0.0
    %1155 = vmatpush.msra.mxu0 0.0
    %1156 = vmatpush.msra.mxu0 0.0
    %1157 = vmatpush.msra.mxu0 0.0
    %1158 = vmatpush.msra.mxu0 0.0
    %1159 = vmatpush.msra.mxu0 %v1139
    %1160 = vmatpush.msra.mxu0 %v1138
    %1161 = vmatpush.msra.mxu0 %v1137
    %1162 = vmatpush.msra.mxu0 %v1136
    %1163 = vmatpush.msra.mxu0 %v1135
    %1164 = vmatpush.msra.mxu0 %v1134
    %1165 = vmatpush.msra.mxu0 %v1133
    %1166 = vmatpush.msra.mxu0 %v1132
    %1167 = vmatmul.f32.gmra.mxu0 %v1146
    %v1168 = vpop.f32.mrf.mxu0
    %v1169 = vadd.f32 %v1142, %v1168
    %1170 = vmatmul.f32.gmra.mxu0 %v1149
    %v1171 = vpop.f32.mrf.mxu0
    %v1172 = vadd.f32 %v1142, %v1171
    %1173 = vdwg.mxu0
    %v1174 = vadd.f32 %v1169, %v1091
    %v1175 = vadd.f32 %v1172, %v1092
    %v1176 = vld [vmem:[%s10] sm:$0x1]
    %v1177 = vld [vmem:[%s11] sm:$0x1]
    %v1178 = vsel %vm70, %v1174, 0.0
    %1179 = vadd.xlane.f32.xlu0 %v1178
    %v1180 = vpop.xlane.xlu0 %1179
    %v1181 = vsel %vm70, %v1175, 0.0
    %1182 = vadd.xlane.f32.xlu0 %v1181
    %v1183 = vpop.xlane.xlu0 %1182
    %v1184 = vmul.f32 %v1180, %v1044
    %v1185 = vmul.f32 %v1183, %v1044
    %v1186 = vsub.f32 %v1174, %v1184
    %v1187 = vsub.f32 %v1175, %v1185
    %v1188 = vmul.f32 %v1186, %v1186
    %v1189 = vmul.f32 %v1187, %v1187
    %v1190 = vsel %vm70, %v1188, 0.0
    %1191 = vadd.xlane.f32.xlu0 %v1190
    %v1192 = vpop.xlane.xlu0 %1191
    %v1193 = vsel %vm70, %v1189, 0.0
    %1194 = vadd.xlane.f32.xlu0 %v1193
    %v1195 = vpop.xlane.xlu0 %1194
    %v1196 = vmul.f32 %v1192, %v1044
    %v1197 = vmul.f32 %v1195, %v1044
    %v1198 = vadd.f32 %v1196, 1e-05
    %v1199 = vadd.f32 %v1197, 1e-05
    %v1200 = vrsqrt.pop %v1198
    %v1201 = vmul.f32 %v1200, %v1198
    %v1202 = vmul.f32 %v1201, %v1200
    %v1203 = vmul.f32 0.5, %v1202
    %v1204 = vsub.f32 1.5, %v1203
    %v1205 = vmul.f32 %v1200, %v1204
    %vm1206 = vweird.f32 %v1198
    %vm1207 = vweird.f32 %v1200
    %vm1208 = vmor %vm1206, %vm1207
    %v1209 = vsel %vm1208, %v1200, %v1205
    %v1210 = vrsqrt.pop %v1199
    %v1211 = vmul.f32 %v1210, %v1199
    %v1212 = vmul.f32 %v1211, %v1210
    %v1213 = vmul.f32 0.5, %v1212
    %v1214 = vsub.f32 1.5, %v1213
    %v1215 = vmul.f32 %v1210, %v1214
    %vm1216 = vweird.f32 %v1199
    %vm1217 = vweird.f32 %v1210
    %vm1218 = vmor %vm1216, %vm1217
    %v1219 = vsel %vm1218, %v1210, %v1215
    %v1220 = vmul.f32 %v1186, %v1209
    %v1221 = vmul.f32 %v1187, %v1219
    %v1223 = vperm.slane %v1176, 0
    %v1225 = vmul.f32 %v1220, %v1223
    %v1226 = vmul.f32 %v1221, %v1223
    %v1228 = vperm.slane %v1177, 0
    %v1230 = vadd.f32 %v1225, %v1228
    %v1231 = vadd.f32 %v1226, %v1228
    %1232 = vst.msk [vmem:[#allocation2] sm:$0xff] %vm70, %v1230
    %1233 = vst.msk [vmem:[#allocation2 + $0x8] sm:$0xff] %vm70, %v1231
    // Predicated region
    $region66: #{tpu_custom_call.1} parent=1 // pred_check
      _
    $region67: #{tpu_custom_call.1} parent=1 // pred_check_branch
      %1235 = sbr.rel (0) target = $region69
    $region68: #{tpu_custom_call.1} parent=1 // pred_region
      %1237 = vsyncadd [#allocation3], 0
      %s1238 = sshll.u32 [#allocation2], 4
      %s1239 = int_to_ptr.vmem [resolvable:$true] %s1238
      %s1240 = sshll.u32 %s16, 4
      %s1241 = int_to_ptr.hbm [resolvable:$true] %s1240
      %1246 = dma.vmem_to_hbm [thread:$0]  %s1239, 256, %s1241, [#allocation3], 128, 128, 8
    $region69: #{tpu_custom_call.1} parent=1 // pred_fallthru
      _
    // Predicated region
    $region70: #{tpu_custom_call.1} parent=1 // pred_check
      _
    $region71: #{tpu_custom_call.1} parent=1 // pred_check_branch
      %1248 = sbr.rel (0) target = $region73
    $region72: #{tpu_custom_call.1} parent=1 // pred_region
      %1250 = dma.done [#allocation3], 256
    $region73: #{tpu_custom_call.1} parent=1 // pred_fallthru
      _
    %1251 = vsyncpa [#allocation3], 1

</llo_original>
